<compile_context>
chip_gen: v5e
topology: v5e:2x2
jax: 0.10.0
libtpu: 0.0.40
codegen_flags: <defaults>
</compile_context>

<pallas_src>
import functools

import numpy as np

import jax
import jax.numpy as jnp
from jax.experimental import pallas as pl
from jax.experimental.pallas import tpu as pltpu


_LANES = 128


def _freq_bands(N_freqs, logscale=True):
    if logscale:
        return [float(2.0 ** k) for k in range(N_freqs)]
    return [float(v) for v in np.linspace(1.0, 2.0 ** (N_freqs - 1), N_freqs)]


def _embedding_kernel(x_ref, o_ref, *, freq_bands, use_double_angle):
    # x_ref: (tb, 128) lane-dense input tile.
    # o_ref: (2*N_freqs+1, tb, 128) band-grouped output tile.
    # Band 0: straight copy of the identity band (no f32 round trip).
    o_ref[0] = x_ref[...].astype(o_ref.dtype)

    n = len(freq_bands)
    step = 2 if use_double_angle else 1
    for k in range(0, n, step):  # static, unrolled over compile-time constants
        # Re-read the tile per (anchor) band: vld has 3 slots and is effectively
        # free, while holding a (tb,128) f32 value live across the whole
        # unrolled band loop would pin up to 64 vregs and force spill traffic
        # that competes with the band stores for the vst slot.
        x = x_ref[...].astype(jnp.float32)
        a = freq_bands[k] * x
        s = jnp.sin(a)
        c = jnp.cos(a)
        o_ref[2 * k + 1] = s.astype(o_ref.dtype)
        o_ref[2 * k + 2] = c.astype(o_ref.dtype)
        if use_double_angle and k + 1 < n:
            # freq_bands[k+1] == 2 * freq_bands[k] exactly (logscale powers of
            # two), so derive the next band with a single double-angle step
            # from the freshly computed anchor (never chained).
            o_ref[2 * k + 3] = (2.0 * s * c).astype(o_ref.dtype)
            o_ref[2 * k + 4] = (1.0 - 2.0 * s * s).astype(o_ref.dtype)


def embedding_forward(x, N_freqs, logscale=True, block_rows=512, out_dtype=None,
                      band_grouped=False):
    """NeRF positional embedding.

    Default: (B, f) -> (B, 2*f*N_freqs + f) in exact PyTorch column order
    [x, sin(f0 x), cos(f0 x), sin(f1 x), ...].

    band_grouped=True: returns (2*N_freqs+1, B, f) straight from the kernel,
    skipping the wrapper permutation (an HBM round trip of the 21x-expanded
    output).  Consumers fold the reorder into their first-layer weights:
        y = einsum('jbf,jfh->bh', grouped, W.reshape(n_bands, f, hidden))

    out_dtype: output dtype (default x.dtype).  jnp.bfloat16 halves the HBM
    write traffic (output bytes are 21x input bytes) when the downstream MLP
    accepts bf16; it cannot meet a 1e-5 tolerance against an f32 reference.
    """
    B, f = x.shape
    n_bands = 2 * N_freqs + 1
    out_f = f * n_bands
    out_dtype = x.dtype if out_dtype is None else jnp.dtype(out_dtype)
    freq_bands = _freq_bands(N_freqs, logscale)
    # Double-angle derivation is only exact when consecutive bands differ by a
    # factor of exactly 2 (logscale); linspace bands are computed directly.
    use_double_angle = bool(logscale) and N_freqs > 1

    # Lane-dense flattened view, zero padded to a whole number of (tb,128) tiles
    # (cdiv + pad: no "B % tb == 0" assert, tail rows are just padding).
    n = B * f
    rows = pl.cdiv(n, _LANES)
    # Native sublane multiple of the *output* dtype so band stores stay
    # unmasked: 8 for 4-byte, 16 for 2-byte, 32 for 1-byte.
    sublane = {4: 8, 2: 16, 1: 32}.get(out_dtype.itemsize, 8)
    tb = min(block_rows, rows)
    tb = max(sublane, ((tb + sublane - 1) // sublane) * sublane)
    rows_pad = pl.cdiv(rows, tb) * tb
    n_pad = rows_pad * _LANES

    x_flat = x.reshape(-1)
    if n_pad != n:
        x_flat = jnp.pad(x_flat, (0, n_pad - n))
    x2d = x_flat.reshape(rows_pad, _LANES)

    kernel = functools.partial(_embedding_kernel, freq_bands=freq_bands,
                               use_double_angle=use_double_angle)

    n_trans = 2 * ((N_freqs + 1) // 2) if use_double_angle else 2 * N_freqs
    grouped = pl.pallas_call(
        kernel,
        out_shape=jax.ShapeDtypeStruct((n_bands, rows_pad, _LANES), out_dtype),
        grid_spec=pltpu.PrefetchScalarGridSpec(
            num_scalar_prefetch=0,
            grid=(rows_pad // tb,),
            in_specs=[pl.BlockSpec((tb, _LANES), lambda i: (i, 0))],
            out_specs=pl.BlockSpec((n_bands, tb, _LANES), lambda i: (0, i, 0)),
        ),
        # v7x has 2 TensorCores: real NeRF batch sizes give a multi-step grid
        # so the "parallel" axis can be sharded across both cores.
        compiler_params=pltpu.CompilerParams(
            dimension_semantics=("parallel",),
        ),
        cost_estimate=pl.CostEstimate(
            flops=6 * N_freqs * n_pad,
            transcendentals=n_trans * n_pad,
            bytes_accessed=int(n_pad * jnp.dtype(x.dtype).itemsize
                               + n_bands * n_pad * out_dtype.itemsize),
        ),
    )(x2d)

    grouped = grouped.reshape(n_bands, n_pad)[:, :n].reshape(n_bands, B, f)
    if band_grouped:
        return grouped
    # Exact PyTorch ordering via one wrapper permutation.  This re-round-trips
    # the 21x-expanded output through HBM; use band_grouped=True when the
    # consumer can fold the reorder into its first-layer weights instead.
    return jnp.transpose(grouped, (1, 0, 2)).reshape(B, out_f)


def embedding_reference(x, N_freqs, logscale=True):
    """Pure-JAX reference matching the PyTorch module."""
    out = [x]
    for freq in _freq_bands(N_freqs, logscale):
        out.append(jnp.sin(freq * x))
        out.append(jnp.cos(freq * x))
    return jnp.concatenate(out, axis=-1)


if __name__ == "__main__":
    key = jax.random.PRNGKey(0)
    f = 3  # xyz coordinates

    # (B=257, N_freqs=10, logscale) exercises tail padding + the double-angle
    # path; (B=64, N_freqs=4, linspace) exercises the direct path.
    for B, N_freqs, logscale in ((257, 10, True), (64, 4, False)):
        kx, key = jax.random.split(key)
        x = jax.random.uniform(kx, (B, f), dtype=jnp.float32,
                               minval=-1.0, maxval=1.0)

        out = jax.block_until_ready(
            embedding_forward(x, N_freqs, logscale=logscale))
        ref = embedding_reference(x, N_freqs, logscale=logscale)
        assert out.shape == (B, 2 * f * N_freqs + f), out.shape
        assert jnp.allclose(out, ref, atol=1e-5, rtol=1e-5), "mismatch vs reference"

        # Fast path: band-grouped layout, no wrapper permutation of the big
        # output.  A consumer folds the reorder into its first-layer weights.
        grouped = jax.block_until_ready(
            embedding_forward(x, N_freqs, logscale=logscale, band_grouped=True))
        assert grouped.shape == (2 * N_freqs + 1, B, f), grouped.shape
        assert jnp.allclose(
            jnp.transpose(grouped, (1, 0, 2)).reshape(B, -1), ref,
            atol=1e-5, rtol=1e-5), "band-grouped layout mismatch"

    print("KERNEL_OK")
</pallas_src>

<mosaic_0001>
module attributes {stable_mosaic.version = 11 : i64} {
  func.func @_embedding_kernel(%arg0: i32, %arg1: memref<8x128xf32, #tpu.memory_space<vmem>>, %arg2: memref<21x8x128xf32, #tpu.memory_space<vmem>>) attributes {dimension_semantics = [#tpu.dimension_semantics<parallel>], iteration_bounds = array<i64: 1>, scalar_prefetch = 0 : i64, scratch_operands = 0 : i64, tpu.core_type = #tpu.core_type<tc>, window_params = [{transform_indices = @transform_0, window_bounds = array<i64: 8, 128>}, {transform_indices = @transform_1, window_bounds = array<i64: 21, 8, 128>}]} {
    %c0 = arith.constant 0 : index
    %c0_0 = arith.constant 0 : index
    %0 = vector.load %arg1[%c0, %c0_0] : memref<8x128xf32, #tpu.memory_space<vmem>>, vector<8x128xf32>
    %c0_1 = arith.constant 0 : index
    %c0_2 = arith.constant 0 : index
    %c0_3 = arith.constant 0 : index
    %1 = vector.load %arg2[%c0_1, %c0_2, %c0_3] : memref<21x8x128xf32, #tpu.memory_space<vmem>>, vector<1x8x128xf32>
    %2 = vector.shape_cast %1 : vector<1x8x128xf32> to vector<8x128xf32>
    %3 = vector.shape_cast %0 : vector<8x128xf32> to vector<1x8x128xf32>
    tpu.vector_store %arg2[%c0_1, %c0_2, %c0_3], %3 {strides = array<i32>} : memref<21x8x128xf32, #tpu.memory_space<vmem>>, vector<1x8x128xf32>,
    %c0_4 = arith.constant 0 : index
    %c0_5 = arith.constant 0 : index
    %4 = vector.load %arg1[%c0_4, %c0_5] : memref<8x128xf32, #tpu.memory_space<vmem>>, vector<8x128xf32>
    %cst = arith.constant 1.000000e+00 : f32
    %5 = vector.broadcast %cst : f32 to vector<8x128xf32>
    %6 = arith.mulf %5, %4 : vector<8x128xf32>
    %7 = math.sin %6 : vector<8x128xf32>
    %8 = math.cos %6 : vector<8x128xf32>
    %c1 = arith.constant 1 : index
    %c0_6 = arith.constant 0 : index
    %c0_7 = arith.constant 0 : index
    %9 = vector.load %arg2[%c1, %c0_6, %c0_7] : memref<21x8x128xf32, #tpu.memory_space<vmem>>, vector<1x8x128xf32>
    %10 = vector.shape_cast %9 : vector<1x8x128xf32> to vector<8x128xf32>
    %11 = vector.shape_cast %7 : vector<8x128xf32> to vector<1x8x128xf32>
    tpu.vector_store %arg2[%c1, %c0_6, %c0_7], %11 {strides = array<i32>} : memref<21x8x128xf32, #tpu.memory_space<vmem>>, vector<1x8x128xf32>,
    %c2 = arith.constant 2 : index
    %c0_8 = arith.constant 0 : index
    %c0_9 = arith.constant 0 : index
    %12 = vector.load %arg2[%c2, %c0_8, %c0_9] : memref<21x8x128xf32, #tpu.memory_space<vmem>>, vector<1x8x128xf32>
    %13 = vector.shape_cast %12 : vector<1x8x128xf32> to vector<8x128xf32>
    %14 = vector.shape_cast %8 : vector<8x128xf32> to vector<1x8x128xf32>
    tpu.vector_store %arg2[%c2, %c0_8, %c0_9], %14 {strides = array<i32>} : memref<21x8x128xf32, #tpu.memory_space<vmem>>, vector<1x8x128xf32>,
    %cst_10 = arith.constant 2.000000e+00 : f32
    %15 = vector.broadcast %cst_10 : f32 to vector<8x128xf32>
    %16 = arith.mulf %15, %7 : vector<8x128xf32>
    %17 = arith.mulf %16, %8 : vector<8x128xf32>
    %c3 = arith.constant 3 : index
    %c0_11 = arith.constant 0 : index
    %c0_12 = arith.constant 0 : index
    %18 = vector.load %arg2[%c3, %c0_11, %c0_12] : memref<21x8x128xf32, #tpu.memory_space<vmem>>, vector<1x8x128xf32>
    %19 = vector.shape_cast %18 : vector<1x8x128xf32> to vector<8x128xf32>
    %20 = vector.shape_cast %17 : vector<8x128xf32> to vector<1x8x128xf32>
    tpu.vector_store %arg2[%c3, %c0_11, %c0_12], %20 {strides = array<i32>} : memref<21x8x128xf32, #tpu.memory_space<vmem>>, vector<1x8x128xf32>,
    %cst_13 = arith.constant 2.000000e+00 : f32
    %21 = vector.broadcast %cst_13 : f32 to vector<8x128xf32>
    %22 = arith.mulf %21, %7 : vector<8x128xf32>
    %23 = arith.mulf %22, %7 : vector<8x128xf32>
    %cst_14 = arith.constant 1.000000e+00 : f32
    %24 = vector.broadcast %cst_14 : f32 to vector<8x128xf32>
    %25 = arith.subf %24, %23 : vector<8x128xf32>
    %c4 = arith.constant 4 : index
    %c0_15 = arith.constant 0 : index
    %c0_16 = arith.constant 0 : index
    %26 = vector.load %arg2[%c4, %c0_15, %c0_16] : memref<21x8x128xf32, #tpu.memory_space<vmem>>, vector<1x8x128xf32>
    %27 = vector.shape_cast %26 : vector<1x8x128xf32> to vector<8x128xf32>
    %28 = vector.shape_cast %25 : vector<8x128xf32> to vector<1x8x128xf32>
    tpu.vector_store %arg2[%c4, %c0_15, %c0_16], %28 {strides = array<i32>} : memref<21x8x128xf32, #tpu.memory_space<vmem>>, vector<1x8x128xf32>,
    %c0_17 = arith.constant 0 : index
    %c0_18 = arith.constant 0 : index
    %29 = vector.load %arg1[%c0_17, %c0_18] : memref<8x128xf32, #tpu.memory_space<vmem>>, vector<8x128xf32>
    %cst_19 = arith.constant 4.000000e+00 : f32
    %30 = vector.broadcast %cst_19 : f32 to vector<8x128xf32>
    %31 = arith.mulf %30, %29 : vector<8x128xf32>
    %32 = math.sin %31 : vector<8x128xf32>
    %33 = math.cos %31 : vector<8x128xf32>
    %c5 = arith.constant 5 : index
    %c0_20 = arith.constant 0 : index
    %c0_21 = arith.constant 0 : index
    %34 = vector.load %arg2[%c5, %c0_20, %c0_21] : memref<21x8x128xf32, #tpu.memory_space<vmem>>, vector<1x8x128xf32>
    %35 = vector.shape_cast %34 : vector<1x8x128xf32> to vector<8x128xf32>
    %36 = vector.shape_cast %32 : vector<8x128xf32> to vector<1x8x128xf32>
    tpu.vector_store %arg2[%c5, %c0_20, %c0_21], %36 {strides = array<i32>} : memref<21x8x128xf32, #tpu.memory_space<vmem>>, vector<1x8x128xf32>,
    %c6 = arith.constant 6 : index
    %c0_22 = arith.constant 0 : index
    %c0_23 = arith.constant 0 : index
    %37 = vector.load %arg2[%c6, %c0_22, %c0_23] : memref<21x8x128xf32, #tpu.memory_space<vmem>>, vector<1x8x128xf32>
    %38 = vector.shape_cast %37 : vector<1x8x128xf32> to vector<8x128xf32>
    %39 = vector.shape_cast %33 : vector<8x128xf32> to vector<1x8x128xf32>
    tpu.vector_store %arg2[%c6, %c0_22, %c0_23], %39 {strides = array<i32>} : memref<21x8x128xf32, #tpu.memory_space<vmem>>, vector<1x8x128xf32>,
    %cst_24 = arith.constant 2.000000e+00 : f32
    %40 = vector.broadcast %cst_24 : f32 to vector<8x128xf32>
    %41 = arith.mulf %40, %32 : vector<8x128xf32>
    %42 = arith.mulf %41, %33 : vector<8x128xf32>
    %c7 = arith.constant 7 : index
    %c0_25 = arith.constant 0 : index
    %c0_26 = arith.constant 0 : index
    %43 = vector.load %arg2[%c7, %c0_25, %c0_26] : memref<21x8x128xf32, #tpu.memory_space<vmem>>, vector<1x8x128xf32>
    %44 = vector.shape_cast %43 : vector<1x8x128xf32> to vector<8x128xf32>
    %45 = vector.shape_cast %42 : vector<8x128xf32> to vector<1x8x128xf32>
    tpu.vector_store %arg2[%c7, %c0_25, %c0_26], %45 {strides = array<i32>} : memref<21x8x128xf32, #tpu.memory_space<vmem>>, vector<1x8x128xf32>,
    %cst_27 = arith.constant 2.000000e+00 : f32
    %46 = vector.broadcast %cst_27 : f32 to vector<8x128xf32>
    %47 = arith.mulf %46, %32 : vector<8x128xf32>
    %48 = arith.mulf %47, %32 : vector<8x128xf32>
    %cst_28 = arith.constant 1.000000e+00 : f32
    %49 = vector.broadcast %cst_28 : f32 to vector<8x128xf32>
    %50 = arith.subf %49, %48 : vector<8x128xf32>
    %c8 = arith.constant 8 : index
    %c0_29 = arith.constant 0 : index
    %c0_30 = arith.constant 0 : index
    %51 = vector.load %arg2[%c8, %c0_29, %c0_30] : memref<21x8x128xf32, #tpu.memory_space<vmem>>, vector<1x8x128xf32>
    %52 = vector.shape_cast %51 : vector<1x8x128xf32> to vector<8x128xf32>
    %53 = vector.shape_cast %50 : vector<8x128xf32> to vector<1x8x128xf32>
    tpu.vector_store %arg2[%c8, %c0_29, %c0_30], %53 {strides = array<i32>} : memref<21x8x128xf32, #tpu.memory_space<vmem>>, vector<1x8x128xf32>,
    %c0_31 = arith.constant 0 : index
    %c0_32 = arith.constant 0 : index
    %54 = vector.load %arg1[%c0_31, %c0_32] : memref<8x128xf32, #tpu.memory_space<vmem>>, vector<8x128xf32>
    %cst_33 = arith.constant 1.600000e+01 : f32
    %55 = vector.broadcast %cst_33 : f32 to vector<8x128xf32>
    %56 = arith.mulf %55, %54 : vector<8x128xf32>
    %57 = math.sin %56 : vector<8x128xf32>
    %58 = math.cos %56 : vector<8x128xf32>
    %c9 = arith.constant 9 : index
    %c0_34 = arith.constant 0 : index
    %c0_35 = arith.constant 0 : index
    %59 = vector.load %arg2[%c9, %c0_34, %c0_35] : memref<21x8x128xf32, #tpu.memory_space<vmem>>, vector<1x8x128xf32>
    %60 = vector.shape_cast %59 : vector<1x8x128xf32> to vector<8x128xf32>
    %61 = vector.shape_cast %57 : vector<8x128xf32> to vector<1x8x128xf32>
    tpu.vector_store %arg2[%c9, %c0_34, %c0_35], %61 {strides = array<i32>} : memref<21x8x128xf32, #tpu.memory_space<vmem>>, vector<1x8x128xf32>,
    %c10 = arith.constant 10 : index
    %c0_36 = arith.constant 0 : index
    %c0_37 = arith.constant 0 : index
    %62 = vector.load %arg2[%c10, %c0_36, %c0_37] : memref<21x8x128xf32, #tpu.memory_space<vmem>>, vector<1x8x128xf32>
    %63 = vector.shape_cast %62 : vector<1x8x128xf32> to vector<8x128xf32>
    %64 = vector.shape_cast %58 : vector<8x128xf32> to vector<1x8x128xf32>
    tpu.vector_store %arg2[%c10, %c0_36, %c0_37], %64 {strides = array<i32>} : memref<21x8x128xf32, #tpu.memory_space<vmem>>, vector<1x8x128xf32>,
    %cst_38 = arith.constant 2.000000e+00 : f32
    %65 = vector.broadcast %cst_38 : f32 to vector<8x128xf32>
    %66 = arith.mulf %65, %57 : vector<8x128xf32>
    %67 = arith.mulf %66, %58 : vector<8x128xf32>
    %c11 = arith.constant 11 : index
    %c0_39 = arith.constant 0 : index
    %c0_40 = arith.constant 0 : index
    %68 = vector.load %arg2[%c11, %c0_39, %c0_40] : memref<21x8x128xf32, #tpu.memory_space<vmem>>, vector<1x8x128xf32>
    %69 = vector.shape_cast %68 : vector<1x8x128xf32> to vector<8x128xf32>
    %70 = vector.shape_cast %67 : vector<8x128xf32> to vector<1x8x128xf32>
    tpu.vector_store %arg2[%c11, %c0_39, %c0_40], %70 {strides = array<i32>} : memref<21x8x128xf32, #tpu.memory_space<vmem>>, vector<1x8x128xf32>,
    %cst_41 = arith.constant 2.000000e+00 : f32
    %71 = vector.broadcast %cst_41 : f32 to vector<8x128xf32>
    %72 = arith.mulf %71, %57 : vector<8x128xf32>
    %73 = arith.mulf %72, %57 : vector<8x128xf32>
    %cst_42 = arith.constant 1.000000e+00 : f32
    %74 = vector.broadcast %cst_42 : f32 to vector<8x128xf32>
    %75 = arith.subf %74, %73 : vector<8x128xf32>
    %c12 = arith.constant 12 : index
    %c0_43 = arith.constant 0 : index
    %c0_44 = arith.constant 0 : index
    %76 = vector.load %arg2[%c12, %c0_43, %c0_44] : memref<21x8x128xf32, #tpu.memory_space<vmem>>, vector<1x8x128xf32>
    %77 = vector.shape_cast %76 : vector<1x8x128xf32> to vector<8x128xf32>
    %78 = vector.shape_cast %75 : vector<8x128xf32> to vector<1x8x128xf32>
    tpu.vector_store %arg2[%c12, %c0_43, %c0_44], %78 {strides = array<i32>} : memref<21x8x128xf32, #tpu.memory_space<vmem>>, vector<1x8x128xf32>,
    %c0_45 = arith.constant 0 : index
    %c0_46 = arith.constant 0 : index
    %79 = vector.load %arg1[%c0_45, %c0_46] : memref<8x128xf32, #tpu.memory_space<vmem>>, vector<8x128xf32>
    %cst_47 = arith.constant 6.400000e+01 : f32
    %80 = vector.broadcast %cst_47 : f32 to vector<8x128xf32>
    %81 = arith.mulf %80, %79 : vector<8x128xf32>
    %82 = math.sin %81 : vector<8x128xf32>
    %83 = math.cos %81 : vector<8x128xf32>
    %c13 = arith.constant 13 : index
    %c0_48 = arith.constant 0 : index
    %c0_49 = arith.constant 0 : index
    %84 = vector.load %arg2[%c13, %c0_48, %c0_49] : memref<21x8x128xf32, #tpu.memory_space<vmem>>, vector<1x8x128xf32>
    %85 = vector.shape_cast %84 : vector<1x8x128xf32> to vector<8x128xf32>
    %86 = vector.shape_cast %82 : vector<8x128xf32> to vector<1x8x128xf32>
    tpu.vector_store %arg2[%c13, %c0_48, %c0_49], %86 {strides = array<i32>} : memref<21x8x128xf32, #tpu.memory_space<vmem>>, vector<1x8x128xf32>,
    %c14 = arith.constant 14 : index
    %c0_50 = arith.constant 0 : index
    %c0_51 = arith.constant 0 : index
    %87 = vector.load %arg2[%c14, %c0_50, %c0_51] : memref<21x8x128xf32, #tpu.memory_space<vmem>>, vector<1x8x128xf32>
    %88 = vector.shape_cast %87 : vector<1x8x128xf32> to vector<8x128xf32>
    %89 = vector.shape_cast %83 : vector<8x128xf32> to vector<1x8x128xf32>
    tpu.vector_store %arg2[%c14, %c0_50, %c0_51], %89 {strides = array<i32>} : memref<21x8x128xf32, #tpu.memory_space<vmem>>, vector<1x8x128xf32>,
    %cst_52 = arith.constant 2.000000e+00 : f32
    %90 = vector.broadcast %cst_52 : f32 to vector<8x128xf32>
    %91 = arith.mulf %90, %82 : vector<8x128xf32>
    %92 = arith.mulf %91, %83 : vector<8x128xf32>
    %c15 = arith.constant 15 : index
    %c0_53 = arith.constant 0 : index
    %c0_54 = arith.constant 0 : index
    %93 = vector.load %arg2[%c15, %c0_53, %c0_54] : memref<21x8x128xf32, #tpu.memory_space<vmem>>, vector<1x8x128xf32>
    %94 = vector.shape_cast %93 : vector<1x8x128xf32> to vector<8x128xf32>
    %95 = vector.shape_cast %92 : vector<8x128xf32> to vector<1x8x128xf32>
    tpu.vector_store %arg2[%c15, %c0_53, %c0_54], %95 {strides = array<i32>} : memref<21x8x128xf32, #tpu.memory_space<vmem>>, vector<1x8x128xf32>,
    %cst_55 = arith.constant 2.000000e+00 : f32
    %96 = vector.broadcast %cst_55 : f32 to vector<8x128xf32>
    %97 = arith.mulf %96, %82 : vector<8x128xf32>
    %98 = arith.mulf %97, %82 : vector<8x128xf32>
    %cst_56 = arith.constant 1.000000e+00 : f32
    %99 = vector.broadcast %cst_56 : f32 to vector<8x128xf32>
    %100 = arith.subf %99, %98 : vector<8x128xf32>
    %c16 = arith.constant 16 : index
    %c0_57 = arith.constant 0 : index
    %c0_58 = arith.constant 0 : index
    %101 = vector.load %arg2[%c16, %c0_57, %c0_58] : memref<21x8x128xf32, #tpu.memory_space<vmem>>, vector<1x8x128xf32>
    %102 = vector.shape_cast %101 : vector<1x8x128xf32> to vector<8x128xf32>
    %103 = vector.shape_cast %100 : vector<8x128xf32> to vector<1x8x128xf32>
    tpu.vector_store %arg2[%c16, %c0_57, %c0_58], %103 {strides = array<i32>} : memref<21x8x128xf32, #tpu.memory_space<vmem>>, vector<1x8x128xf32>,
    %c0_59 = arith.constant 0 : index
    %c0_60 = arith.constant 0 : index
    %104 = vector.load %arg1[%c0_59, %c0_60] : memref<8x128xf32, #tpu.memory_space<vmem>>, vector<8x128xf32>
    %cst_61 = arith.constant 2.560000e+02 : f32
    %105 = vector.broadcast %cst_61 : f32 to vector<8x128xf32>
    %106 = arith.mulf %105, %104 : vector<8x128xf32>
    %107 = math.sin %106 : vector<8x128xf32>
    %108 = math.cos %106 : vector<8x128xf32>
    %c17 = arith.constant 17 : index
    %c0_62 = arith.constant 0 : index
    %c0_63 = arith.constant 0 : index
    %109 = vector.load %arg2[%c17, %c0_62, %c0_63] : memref<21x8x128xf32, #tpu.memory_space<vmem>>, vector<1x8x128xf32>
    %110 = vector.shape_cast %109 : vector<1x8x128xf32> to vector<8x128xf32>
    %111 = vector.shape_cast %107 : vector<8x128xf32> to vector<1x8x128xf32>
    tpu.vector_store %arg2[%c17, %c0_62, %c0_63], %111 {strides = array<i32>} : memref<21x8x128xf32, #tpu.memory_space<vmem>>, vector<1x8x128xf32>,
    %c18 = arith.constant 18 : index
    %c0_64 = arith.constant 0 : index
    %c0_65 = arith.constant 0 : index
    %112 = vector.load %arg2[%c18, %c0_64, %c0_65] : memref<21x8x128xf32, #tpu.memory_space<vmem>>, vector<1x8x128xf32>
    %113 = vector.shape_cast %112 : vector<1x8x128xf32> to vector<8x128xf32>
    %114 = vector.shape_cast %108 : vector<8x128xf32> to vector<1x8x128xf32>
    tpu.vector_store %arg2[%c18, %c0_64, %c0_65], %114 {strides = array<i32>} : memref<21x8x128xf32, #tpu.memory_space<vmem>>, vector<1x8x128xf32>,
    %cst_66 = arith.constant 2.000000e+00 : f32
    %115 = vector.broadcast %cst_66 : f32 to vector<8x128xf32>
    %116 = arith.mulf %115, %107 : vector<8x128xf32>
    %117 = arith.mulf %116, %108 : vector<8x128xf32>
    %c19 = arith.constant 19 : index
    %c0_67 = arith.constant 0 : index
    %c0_68 = arith.constant 0 : index
    %118 = vector.load %arg2[%c19, %c0_67, %c0_68] : memref<21x8x128xf32, #tpu.memory_space<vmem>>, vector<1x8x128xf32>
    %119 = vector.shape_cast %118 : vector<1x8x128xf32> to vector<8x128xf32>
    %120 = vector.shape_cast %117 : vector<8x128xf32> to vector<1x8x128xf32>
    tpu.vector_store %arg2[%c19, %c0_67, %c0_68], %120 {strides = array<i32>} : memref<21x8x128xf32, #tpu.memory_space<vmem>>, vector<1x8x128xf32>,
    %cst_69 = arith.constant 2.000000e+00 : f32
    %121 = vector.broadcast %cst_69 : f32 to vector<8x128xf32>
    %122 = arith.mulf %121, %107 : vector<8x128xf32>
    %123 = arith.mulf %122, %107 : vector<8x128xf32>
    %cst_70 = arith.constant 1.000000e+00 : f32
    %124 = vector.broadcast %cst_70 : f32 to vector<8x128xf32>
    %125 = arith.subf %124, %123 : vector<8x128xf32>
    %c20 = arith.constant 20 : index
    %c0_71 = arith.constant 0 : index
    %c0_72 = arith.constant 0 : index
    %126 = vector.load %arg2[%c20, %c0_71, %c0_72] : memref<21x8x128xf32, #tpu.memory_space<vmem>>, vector<1x8x128xf32>
    %127 = vector.shape_cast %126 : vector<1x8x128xf32> to vector<8x128xf32>
    %128 = vector.shape_cast %125 : vector<8x128xf32> to vector<1x8x128xf32>
    tpu.vector_store %arg2[%c20, %c0_71, %c0_72], %128 {strides = array<i32>} : memref<21x8x128xf32, #tpu.memory_space<vmem>>, vector<1x8x128xf32>,
    return
  }
  func.func @transform_0(%arg0: i32) -> (i32, i32) {
    %c0_i32 = arith.constant 0 : i32
    %c0_i32_0 = arith.constant 0 : i32
    return %arg0, %c0_i32 : i32, i32
  }
  func.func @transform_1(%arg0: i32) -> (i32, i32, i32) {
    %c0_i32 = arith.constant 0 : i32
    %c0_i32_0 = arith.constant 0 : i32
    %c0_i32_1 = arith.constant 0 : i32
    return %c0_i32, %arg0, %c0_i32_0 : i32, i32, i32
  }
}

</mosaic_0001>

<llo_original>
// kernel: tpu_custom_call.1
$region0: #{tpu_custom_call.1}
  #allocation0 [shape = 'u32[]', space=smem, size = 0x4, offset = 0x4, fixed_abs, tag = 'smem constant byte address 0x4 - core index']
  #allocation1 [shape = 'u32[72,128]{1,0:T(1,128)}', space=vmem, size = 0x9000, scoped, tag = 'internal scratch']
  %s0 = inlined_call_operand.hbm [shape: f32[8,128], index: 0, kind: input, shape index: {}]
  %s1 = inlined_call_operand.hbm [shape: f32[21,8,128], index: 1, kind: output, shape index: {}]
  %s2 = sld [smem:[#allocation0]]
  $region18: #{tpu_custom_call.1} parent=0
    _
  %s4 = ssub.s32 1, %s2
  %s5 = scalar_select 0, %s4, %s2
  $region1: #{tpu_custom_call.1} parent=0
    #allocation2 [shape = 'u8[4096]{0}', space=vmem, size = 0x1000, scoped, tag = 'input window, operand 0, single buffered']
    #allocation3 [shape = 's32[1]{0}', space=sflag, size = 0x4, scoped, tag = 'scoped memory for tpu_custom_call.1']
    #allocation4 [shape = 's32[1]{0}', space=sflag, size = 0x4, scoped, tag = 'scoped memory for tpu_custom_call.1']
    #allocation5 [shape = 'u8[86016]{0}', space=vmem, size = 0x15000, scoped, tag = 'output window, operand 0, single buffered']
    %6 = vsyncpa [#allocation3], 0
    %7 = vsyncpa [#allocation4], 0
    // Predicated region
    $region2: #{tpu_custom_call.1} parent=1 // pred_check
      _
    $region3: #{tpu_custom_call.1} parent=1 // pred_check_branch
      %9 = sbr.rel (0) target = $region5
    $region4: #{tpu_custom_call.1} parent=1 // pred_region
      %11 = vsyncadd [#allocation3], 0
      %s13 = sshll.u32 %s0, 4
      %s14 = int_to_ptr.hbm [resolvable:$true] %s13
      %s15 = sshll.u32 [#allocation2], 4
      %s16 = int_to_ptr.vmem [resolvable:$true] %s15
      %18 = dma.hbm_to_vmem [thread:$0]  %s14, 128, %s16, [#allocation3]
    $region5: #{tpu_custom_call.1} parent=1 // pred_fallthru
      _
    // Predicated region
    $region6: #{tpu_custom_call.1} parent=1 // pred_check
      _
    $region7: #{tpu_custom_call.1} parent=1 // pred_check_branch
      %20 = sbr.rel (0) target = $region9
    $region8: #{tpu_custom_call.1} parent=1 // pred_region
      %22 = dma.done [#allocation3], 128
    $region9: #{tpu_custom_call.1} parent=1 // pred_fallthru
      _
    %v23 = vld [vmem:[#allocation2] sm:$0xff]
    %24 = vst [vmem:[#allocation5] sm:$0xff] %v23
    %v25 = vld [vmem:[#allocation2] sm:$0xff]
    %v26 = vand.u32 2147483647, %v25
    %vm27 = vcmp.le.f32.partialorder %v26, 0.7853982
    %vm28 = vcmp.lt.s32.totalorder %v25, 0
    %v29 = vand.u32 %v25, 2139095040
    %v30 = vshrl.u32 %v29, 23
    %v31 = vsub.s32 %v30, 127
    %v32 = vand.u32 2147483647, %v25
    %v33 = vand.u32 %v32, 8388607
    %v34 = vor.u32 %v33, 8388608
    %v35 = vsub.s32 0, %v34
    %v36 = vadd.s32 %v31, 1
    %vm37 = vcmp.gt.s32.totalorder %v36, 0
    %v38 = vsel %vm37, %v36, 0
    %v39 = vshrl.u32 %v38, 5
    %v40 = vand.u32 %v38, 31
    %v41 = vsub.s32 32, %v40
    %v42 = vshrl.u32 683565275, %v41
    %v43 = vshll.u32 683565275, %v40
    %v44 = vshrl.u32 2475754826, %v41
    %v45 = vor.u32 %v43, %v44
    %v46 = vshll.u32 2475754826, %v40
    %v47 = vshrl.u32 2131351028, %v41
    %v48 = vor.u32 %v46, %v47
    %v49 = vshll.u32 2131351028, %v40
    %v50 = vshrl.u32 2102212464, %v41
    %v51 = vor.u32 %v49, %v50
    %v52 = vshll.u32 2102212464, %v40
    %v53 = vshrl.u32 920167782, %v41
    %v54 = vor.u32 %v52, %v53
    %v55 = vshll.u32 920167782, %v40
    %v56 = vshrl.u32 1326507024, %v41
    %v57 = vor.u32 %v55, %v56
    %vm58 = vcmp.lt.s32.totalorder %v39, 1
    %vm59 = vcmp.lt.s32.totalorder %v39, 2
    %vm60 = vcmp.lt.s32.totalorder %v39, 3
    %vm61 = vcmp.lt.s32.totalorder %v39, 4
    %v62 = vsel %vm58, %v42, %v45
    %v63 = vsel %vm61, %v51, 2102212464
    %v64 = vsel %vm60, %v48, %v63
    %v65 = vsel %vm59, %v62, %v64
    %v66 = vsel %vm58, %v45, %v48
    %v67 = vsel %vm61, %v54, 920167782
    %v68 = vsel %vm60, %v51, %v67
    %v69 = vsel %vm59, %v66, %v68
    %v70 = vsel %vm58, %v48, %v51
    %v71 = vsel %vm61, %v57, 1326507024
    %v72 = vsel %vm60, %v54, %v71
    %v73 = vsel %vm59, %v70, %v72
    %v74 = vshll.u32 %v34, 8
    %v75 = vand.u32 %v74, 65535
    %v76 = vshrl.u32 %v74, 16
    %v77 = vand.u32 %v73, 65535
    %v78 = vshrl.u32 %v73, 16
    %v79 = vmul.u32 %v75, %v77
    %v80 = vmul.u32 %v75, %v78
    %v81 = vmul.u32 %v76, %v77
    %v82 = vmul.u32 %v76, %v78
    %v83 = vshll.u32 %v80, 16
    %v84 = vshrl.u32 %v80, 16
    %v85 = vshll.u32 %v81, 16
    %v86 = vshrl.u32 %v81, 16
    %vm87 = vc.u32 %v79, %v83
    %v88 = vsel %vm87, 1, 0
    %v89 = vadd.s32 %v79, %v83
    %v90 = vadd.s32 %v82, %v88
    %vm91 = vc.u32 %v89, %v85
    %v92 = vsel %vm91, 1, 0
    %v93 = vadd.s32 %v89, %v85
    %v94 = vadd.s32 %v90, %v92
    %v95 = vadd.s32 %v94, %v84
    %v96 = vadd.s32 %v95, %v86
    %v97 = vand.u32 %v74, 65535
    %v98 = vshrl.u32 %v74, 16
    %v99 = vand.u32 %v69, 65535
    %v100 = vshrl.u32 %v69, 16
    %v101 = vmul.u32 %v97, %v99
    %v102 = vmul.u32 %v97, %v100
    %v103 = vmul.u32 %v98, %v99
    %v104 = vmul.u32 %v98, %v100
    %v105 = vshll.u32 %v102, 16
    %v106 = vshrl.u32 %v102, 16
    %v107 = vshll.u32 %v103, 16
    %v108 = vshrl.u32 %v103, 16
    %vm109 = vc.u32 %v101, %v105
    %v110 = vsel %vm109, 1, 0
    %v111 = vadd.s32 %v101, %v105
    %v112 = vadd.s32 %v104, %v110
    %vm113 = vc.u32 %v111, %v107
    %v114 = vsel %vm113, 1, 0
    %v115 = vadd.s32 %v111, %v107
    %v116 = vadd.s32 %v112, %v114
    %v117 = vadd.s32 %v116, %v106
    %v118 = vadd.s32 %v117, %v108
    %v119 = vmul.u32 %v74, %v65
    %v120 = vadd.s32 %v96, %v115
    %vm121 = vc.u32 %v96, %v115
    %v122 = vadd.s32 %v118, 1
    %v123 = vsel %vm121, %v122, %v118
    %v124 = vadd.s32 %v119, %v123
    %v125 = vadd.s32 %v124, 536870912
    %v126 = vshrl.u32 %v125, 30
    %v127 = vshll.u32 %v126, 30
    %v128 = vsub.s32 %v124, %v127
    %vm129 = vcmp.lt.s32.totalorder %v128, 0
    %v130 = vsub.s32 0, %v128
    %v131 = vsel %vm129, %v130, %v128
    %v132 = vclz %v131
    %v133 = vsub.s32 %v132, 2
    %vm134 = vcmp.gt.s32.totalorder 0, %v133
    %v135 = vsel %vm134, 0, %v133
    %v136 = vsub.s32 32, %v135
    %v137 = vshll.u32 %v128, %v135
    %v138 = vshrl.u32 %v120, %v136
    %v139 = vor.u32 %v137, %v138
    %v140 = vsub.s32 4294967266, %v135
    %v141 = vadd.s32 %v140, 127
    %v142 = vshll.u32 %v141, 23
    %v143 = vor.u32 4788187, %v142
    %v144 = vand.u32 2147483647, %v143
    %v146 = vcvt.s32.f32 %v139
    %v147 = vmul.f32 %v146, %v144
    %v148 = vxor.u32 %v147, 2147483648
    %v149 = vsel %vm28, %v148, %v147
    %v150 = vsub.s32 4, %v126
    %v151 = vsel %vm28, %v150, %v126
    %v152 = vsel %vm27, %v25, %v149
    %v153 = vsel %vm27, 0, %v151
    %v154 = vmul.f32 %v152, %v152
    %v155 = vmul.f32 %v154, -0.001358992
    %v156 = vadd.f32 %v155, 0.041655596
    %v157 = vmul.f32 %v154, %v156
    %v158 = vadd.f32 %v157, -0.4999988
    %v159 = vmul.f32 %v154, %v158
    %v160 = vadd.f32 1.0, %v159
    %v161 = vmul.f32 %v152, %v152
    %v162 = vmul.f32 %v161, -0.00019511016
    %v163 = vadd.f32 %v162, 0.008332121
    %v164 = vmul.f32 %v161, %v163
    %v165 = vadd.f32 %v164, -0.16666654
    %v166 = vmul.f32 %v161, %v165
    %v167 = vadd.f32 %v166, 1.0
    %v168 = vmul.f32 %v167, %v152
    %vm169 = vweird.f32 %v25
    %v170 = vadd.s32 %v153, 3
    %v171 = vand.u32 %v170, 3
    %vm172 = vcmp.lt.s32.totalorder %v171, 2
    %vm173 = vcmp.eq.s32.totalorder %v171, 0
    %v174 = vxor.u32 %v168, 2147483648
    %v175 = vsel %vm173, %v160, %v174
    %vm176 = vcmp.eq.s32.totalorder %v171, 2
    %v177 = vxor.u32 %v160, 2147483648
    %v178 = vsel %vm176, %v177, %v168
    %v179 = vsel %vm172, %v175, %v178
    %v180 = vsel %vm169, nan, %v179
    %v181 = vand.u32 2147483647, %v25
    %vm182 = vcmp.le.f32.partialorder %v181, 0.7853982
    %vm183 = vcmp.lt.s32.totalorder %v25, 0
    %v184 = vand.u32 %v25, 2139095040
    %v185 = vshrl.u32 %v184, 23
    %v186 = vsub.s32 %v185, 127
    %v187 = vand.u32 2147483647, %v25
    %v188 = vand.u32 %v187, 8388607
    %v189 = vor.u32 %v188, 8388608
    %v190 = vsub.s32 0, %v189
    %v191 = vadd.s32 %v186, 1
    %vm192 = vcmp.gt.s32.totalorder %v191, 0
    %v193 = vsel %vm192, %v191, 0
    %v194 = vshrl.u32 %v193, 5
    %v195 = vand.u32 %v193, 31
    %v196 = vsub.s32 32, %v195
    %v197 = vshrl.u32 683565275, %v196
    %v198 = vshll.u32 683565275, %v195
    %v199 = vshrl.u32 2475754826, %v196
    %v200 = vor.u32 %v198, %v199
    %v201 = vshll.u32 2475754826, %v195
    %v202 = vshrl.u32 2131351028, %v196
    %v203 = vor.u32 %v201, %v202
    %v204 = vshll.u32 2131351028, %v195
    %v205 = vshrl.u32 2102212464, %v196
    %v206 = vor.u32 %v204, %v205
    %v207 = vshll.u32 2102212464, %v195
    %v208 = vshrl.u32 920167782, %v196
    %v209 = vor.u32 %v207, %v208
    %v210 = vshll.u32 920167782, %v195
    %v211 = vshrl.u32 1326507024, %v196
    %v212 = vor.u32 %v210, %v211
    %vm213 = vcmp.lt.s32.totalorder %v194, 1
    %vm214 = vcmp.lt.s32.totalorder %v194, 2
    %vm215 = vcmp.lt.s32.totalorder %v194, 3
    %vm216 = vcmp.lt.s32.totalorder %v194, 4
    %v217 = vsel %vm213, %v197, %v200
    %v218 = vsel %vm216, %v206, 2102212464
    %v219 = vsel %vm215, %v203, %v218
    %v220 = vsel %vm214, %v217, %v219
    %v221 = vsel %vm213, %v200, %v203
    %v222 = vsel %vm216, %v209, 920167782
    %v223 = vsel %vm215, %v206, %v222
    %v224 = vsel %vm214, %v221, %v223
    %v225 = vsel %vm213, %v203, %v206
    %v226 = vsel %vm216, %v212, 1326507024
    %v227 = vsel %vm215, %v209, %v226
    %v228 = vsel %vm214, %v225, %v227
    %v229 = vshll.u32 %v189, 8
    %v230 = vand.u32 %v229, 65535
    %v231 = vshrl.u32 %v229, 16
    %v232 = vand.u32 %v228, 65535
    %v233 = vshrl.u32 %v228, 16
    %v234 = vmul.u32 %v230, %v232
    %v235 = vmul.u32 %v230, %v233
    %v236 = vmul.u32 %v231, %v232
    %v237 = vmul.u32 %v231, %v233
    %v238 = vshll.u32 %v235, 16
    %v239 = vshrl.u32 %v235, 16
    %v240 = vshll.u32 %v236, 16
    %v241 = vshrl.u32 %v236, 16
    %vm242 = vc.u32 %v234, %v238
    %v243 = vsel %vm242, 1, 0
    %v244 = vadd.s32 %v234, %v238
    %v245 = vadd.s32 %v237, %v243
    %vm246 = vc.u32 %v244, %v240
    %v247 = vsel %vm246, 1, 0
    %v248 = vadd.s32 %v244, %v240
    %v249 = vadd.s32 %v245, %v247
    %v250 = vadd.s32 %v249, %v239
    %v251 = vadd.s32 %v250, %v241
    %v252 = vand.u32 %v229, 65535
    %v253 = vshrl.u32 %v229, 16
    %v254 = vand.u32 %v224, 65535
    %v255 = vshrl.u32 %v224, 16
    %v256 = vmul.u32 %v252, %v254
    %v257 = vmul.u32 %v252, %v255
    %v258 = vmul.u32 %v253, %v254
    %v259 = vmul.u32 %v253, %v255
    %v260 = vshll.u32 %v257, 16
    %v261 = vshrl.u32 %v257, 16
    %v262 = vshll.u32 %v258, 16
    %v263 = vshrl.u32 %v258, 16
    %vm264 = vc.u32 %v256, %v260
    %v265 = vsel %vm264, 1, 0
    %v266 = vadd.s32 %v256, %v260
    %v267 = vadd.s32 %v259, %v265
    %vm268 = vc.u32 %v266, %v262
    %v269 = vsel %vm268, 1, 0
    %v270 = vadd.s32 %v266, %v262
    %v271 = vadd.s32 %v267, %v269
    %v272 = vadd.s32 %v271, %v261
    %v273 = vadd.s32 %v272, %v263
    %v274 = vmul.u32 %v229, %v220
    %v275 = vadd.s32 %v251, %v270
    %vm276 = vc.u32 %v251, %v270
    %v277 = vadd.s32 %v273, 1
    %v278 = vsel %vm276, %v277, %v273
    %v279 = vadd.s32 %v274, %v278
    %v280 = vadd.s32 %v279, 536870912
    %v281 = vshrl.u32 %v280, 30
    %v282 = vshll.u32 %v281, 30
    %v283 = vsub.s32 %v279, %v282
    %vm284 = vcmp.lt.s32.totalorder %v283, 0
    %v285 = vsub.s32 0, %v283
    %v286 = vsel %vm284, %v285, %v283
    %v287 = vclz %v286
    %v288 = vsub.s32 %v287, 2
    %vm289 = vcmp.gt.s32.totalorder 0, %v288
    %v290 = vsel %vm289, 0, %v288
    %v291 = vsub.s32 32, %v290
    %v292 = vshll.u32 %v283, %v290
    %v293 = vshrl.u32 %v275, %v291
    %v294 = vor.u32 %v292, %v293
    %v295 = vsub.s32 4294967266, %v290
    %v296 = vadd.s32 %v295, 127
    %v297 = vshll.u32 %v296, 23
    %v298 = vor.u32 4788187, %v297
    %v299 = vand.u32 2147483647, %v298
    %v301 = vcvt.s32.f32 %v294
    %v302 = vmul.f32 %v301, %v299
    %v303 = vxor.u32 %v302, 2147483648
    %v304 = vsel %vm183, %v303, %v302
    %v305 = vsub.s32 4, %v281
    %v306 = vsel %vm183, %v305, %v281
    %v307 = vsel %vm182, %v25, %v304
    %v308 = vsel %vm182, 0, %v306
    %v309 = vmul.f32 %v307, %v307
    %v310 = vmul.f32 %v309, -0.001358992
    %v311 = vadd.f32 %v310, 0.041655596
    %v312 = vmul.f32 %v309, %v311
    %v313 = vadd.f32 %v312, -0.4999988
    %v314 = vmul.f32 %v309, %v313
    %v315 = vadd.f32 1.0, %v314
    %v316 = vmul.f32 %v307, %v307
    %v317 = vmul.f32 %v316, -0.00019511016
    %v318 = vadd.f32 %v317, 0.008332121
    %v319 = vmul.f32 %v316, %v318
    %v320 = vadd.f32 %v319, -0.16666654
    %v321 = vmul.f32 %v316, %v320
    %v322 = vadd.f32 %v321, 1.0
    %v323 = vmul.f32 %v322, %v307
    %vm324 = vweird.f32 %v25
    %v325 = vand.u32 %v308, 3
    %vm326 = vcmp.lt.s32.totalorder %v325, 2
    %vm327 = vcmp.eq.s32.totalorder %v325, 0
    %v328 = vxor.u32 %v323, 2147483648
    %v329 = vsel %vm327, %v315, %v328
    %vm330 = vcmp.eq.s32.totalorder %v325, 2
    %v331 = vxor.u32 %v315, 2147483648
    %v332 = vsel %vm330, %v331, %v323
    %v333 = vsel %vm326, %v329, %v332
    %v334 = vsel %vm324, nan, %v333
    %s335 = scalar_lea.vmem [#allocation5], 8
    %336 = vst [vmem:[%s335] sm:$0xff] %v180
    %s337 = scalar_lea.vmem [#allocation5], 16
    %338 = vst [vmem:[%s337] sm:$0xff] %v334
    %v339 = vmul.f32 %v180, 2.0
    %v340 = vmul.f32 %v339, %v334
    %s341 = scalar_lea.vmem [#allocation5], 24
    %342 = vst [vmem:[%s341] sm:$0xff] %v340
    %v343 = vmul.f32 %v339, %v180
    %v344 = vsub.f32 1.0, %v343
    %s345 = scalar_lea.vmem [#allocation5], 32
    %346 = vst [vmem:[%s345] sm:$0xff] %v344
    %v347 = vld [vmem:[#allocation2] sm:$0xff]
    %v348 = vmul.f32 %v347, 4.0
    %v349 = vand.u32 2147483647, %v348
    %vm350 = vcmp.le.f32.partialorder %v349, 0.7853982
    %vm351 = vcmp.lt.s32.totalorder %v348, 0
    %v352 = vand.u32 %v348, 2139095040
    %v353 = vshrl.u32 %v352, 23
    %v354 = vsub.s32 %v353, 127
    %v355 = vand.u32 2147483647, %v348
    %v356 = vand.u32 %v355, 8388607
    %v357 = vor.u32 %v356, 8388608
    %v358 = vsub.s32 0, %v357
    %v359 = vadd.s32 %v354, 1
    %vm360 = vcmp.gt.s32.totalorder %v359, 0
    %v361 = vsel %vm360, %v359, 0
    %v362 = vshrl.u32 %v361, 5
    %v363 = vand.u32 %v361, 31
    %v364 = vsub.s32 32, %v363
    %v365 = vshrl.u32 683565275, %v364
    %v366 = vshll.u32 683565275, %v363
    %v367 = vshrl.u32 2475754826, %v364
    %v368 = vor.u32 %v366, %v367
    %v369 = vshll.u32 2475754826, %v363
    %v370 = vshrl.u32 2131351028, %v364
    %v371 = vor.u32 %v369, %v370
    %v372 = vshll.u32 2131351028, %v363
    %v373 = vshrl.u32 2102212464, %v364
    %v374 = vor.u32 %v372, %v373
    %v375 = vshll.u32 2102212464, %v363
    %v376 = vshrl.u32 920167782, %v364
    %v377 = vor.u32 %v375, %v376
    %v378 = vshll.u32 920167782, %v363
    %v379 = vshrl.u32 1326507024, %v364
    %v380 = vor.u32 %v378, %v379
    %vm381 = vcmp.lt.s32.totalorder %v362, 1
    %vm382 = vcmp.lt.s32.totalorder %v362, 2
    %vm383 = vcmp.lt.s32.totalorder %v362, 3
    %vm384 = vcmp.lt.s32.totalorder %v362, 4
    %v385 = vsel %vm381, %v365, %v368
    %v386 = vsel %vm384, %v374, 2102212464
    %v387 = vsel %vm383, %v371, %v386
    %v388 = vsel %vm382, %v385, %v387
    %v389 = vsel %vm381, %v368, %v371
    %v390 = vsel %vm384, %v377, 920167782
    %v391 = vsel %vm383, %v374, %v390
    %v392 = vsel %vm382, %v389, %v391
    %v393 = vsel %vm381, %v371, %v374
    %v394 = vsel %vm384, %v380, 1326507024
    %v395 = vsel %vm383, %v377, %v394
    %v396 = vsel %vm382, %v393, %v395
    %v397 = vshll.u32 %v357, 8
    %v398 = vand.u32 %v397, 65535
    %v399 = vshrl.u32 %v397, 16
    %v400 = vand.u32 %v396, 65535
    %v401 = vshrl.u32 %v396, 16
    %v402 = vmul.u32 %v398, %v400
    %v403 = vmul.u32 %v398, %v401
    %v404 = vmul.u32 %v399, %v400
    %v405 = vmul.u32 %v399, %v401
    %v406 = vshll.u32 %v403, 16
    %v407 = vshrl.u32 %v403, 16
    %v408 = vshll.u32 %v404, 16
    %v409 = vshrl.u32 %v404, 16
    %vm410 = vc.u32 %v402, %v406
    %v411 = vsel %vm410, 1, 0
    %v412 = vadd.s32 %v402, %v406
    %v413 = vadd.s32 %v405, %v411
    %vm414 = vc.u32 %v412, %v408
    %v415 = vsel %vm414, 1, 0
    %v416 = vadd.s32 %v412, %v408
    %v417 = vadd.s32 %v413, %v415
    %v418 = vadd.s32 %v417, %v407
    %v419 = vadd.s32 %v418, %v409
    %v420 = vand.u32 %v397, 65535
    %v421 = vshrl.u32 %v397, 16
    %v422 = vand.u32 %v392, 65535
    %v423 = vshrl.u32 %v392, 16
    %v424 = vmul.u32 %v420, %v422
    %v425 = vmul.u32 %v420, %v423
    %v426 = vmul.u32 %v421, %v422
    %v427 = vmul.u32 %v421, %v423
    %v428 = vshll.u32 %v425, 16
    %v429 = vshrl.u32 %v425, 16
    %v430 = vshll.u32 %v426, 16
    %v431 = vshrl.u32 %v426, 16
    %vm432 = vc.u32 %v424, %v428
    %v433 = vsel %vm432, 1, 0
    %v434 = vadd.s32 %v424, %v428
    %v435 = vadd.s32 %v427, %v433
    %vm436 = vc.u32 %v434, %v430
    %v437 = vsel %vm436, 1, 0
    %v438 = vadd.s32 %v434, %v430
    %v439 = vadd.s32 %v435, %v437
    %v440 = vadd.s32 %v439, %v429
    %v441 = vadd.s32 %v440, %v431
    %v442 = vmul.u32 %v397, %v388
    %v443 = vadd.s32 %v419, %v438
    %vm444 = vc.u32 %v419, %v438
    %v445 = vadd.s32 %v441, 1
    %v446 = vsel %vm444, %v445, %v441
    %v447 = vadd.s32 %v442, %v446
    %v448 = vadd.s32 %v447, 536870912
    %v449 = vshrl.u32 %v448, 30
    %v450 = vshll.u32 %v449, 30
    %v451 = vsub.s32 %v447, %v450
    %vm452 = vcmp.lt.s32.totalorder %v451, 0
    %v453 = vsub.s32 0, %v451
    %v454 = vsel %vm452, %v453, %v451
    %v455 = vclz %v454
    %v456 = vsub.s32 %v455, 2
    %vm457 = vcmp.gt.s32.totalorder 0, %v456
    %v458 = vsel %vm457, 0, %v456
    %v459 = vsub.s32 32, %v458
    %v460 = vshll.u32 %v451, %v458
    %v461 = vshrl.u32 %v443, %v459
    %v462 = vor.u32 %v460, %v461
    %v463 = vsub.s32 4294967266, %v458
    %v464 = vadd.s32 %v463, 127
    %v465 = vshll.u32 %v464, 23
    %v466 = vor.u32 4788187, %v465
    %v467 = vand.u32 2147483647, %v466
    %v469 = vcvt.s32.f32 %v462
    %v470 = vmul.f32 %v469, %v467
    %v471 = vxor.u32 %v470, 2147483648
    %v472 = vsel %vm351, %v471, %v470
    %v473 = vsub.s32 4, %v449
    %v474 = vsel %vm351, %v473, %v449
    %v475 = vsel %vm350, %v348, %v472
    %v476 = vsel %vm350, 0, %v474
    %v477 = vmul.f32 %v475, %v475
    %v478 = vmul.f32 %v477, -0.001358992
    %v479 = vadd.f32 %v478, 0.041655596
    %v480 = vmul.f32 %v477, %v479
    %v481 = vadd.f32 %v480, -0.4999988
    %v482 = vmul.f32 %v477, %v481
    %v483 = vadd.f32 1.0, %v482
    %v484 = vmul.f32 %v475, %v475
    %v485 = vmul.f32 %v484, -0.00019511016
    %v486 = vadd.f32 %v485, 0.008332121
    %v487 = vmul.f32 %v484, %v486
    %v488 = vadd.f32 %v487, -0.16666654
    %v489 = vmul.f32 %v484, %v488
    %v490 = vadd.f32 %v489, 1.0
    %v491 = vmul.f32 %v490, %v475
    %vm492 = vweird.f32 %v348
    %v493 = vadd.s32 %v476, 3
    %v494 = vand.u32 %v493, 3
    %vm495 = vcmp.lt.s32.totalorder %v494, 2
    %vm496 = vcmp.eq.s32.totalorder %v494, 0
    %v497 = vxor.u32 %v491, 2147483648
    %v498 = vsel %vm496, %v483, %v497
    %vm499 = vcmp.eq.s32.totalorder %v494, 2
    %v500 = vxor.u32 %v483, 2147483648
    %v501 = vsel %vm499, %v500, %v491
    %v502 = vsel %vm495, %v498, %v501
    %v503 = vsel %vm492, nan, %v502
    %v504 = vand.u32 2147483647, %v348
    %vm505 = vcmp.le.f32.partialorder %v504, 0.7853982
    %vm506 = vcmp.lt.s32.totalorder %v348, 0
    %v507 = vand.u32 %v348, 2139095040
    %v508 = vshrl.u32 %v507, 23
    %v509 = vsub.s32 %v508, 127
    %v510 = vand.u32 2147483647, %v348
    %v511 = vand.u32 %v510, 8388607
    %v512 = vor.u32 %v511, 8388608
    %v513 = vsub.s32 0, %v512
    %v514 = vadd.s32 %v509, 1
    %vm515 = vcmp.gt.s32.totalorder %v514, 0
    %v516 = vsel %vm515, %v514, 0
    %v517 = vshrl.u32 %v516, 5
    %v518 = vand.u32 %v516, 31
    %v519 = vsub.s32 32, %v518
    %v520 = vshrl.u32 683565275, %v519
    %v521 = vshll.u32 683565275, %v518
    %v522 = vshrl.u32 2475754826, %v519
    %v523 = vor.u32 %v521, %v522
    %v524 = vshll.u32 2475754826, %v518
    %v525 = vshrl.u32 2131351028, %v519
    %v526 = vor.u32 %v524, %v525
    %v527 = vshll.u32 2131351028, %v518
    %v528 = vshrl.u32 2102212464, %v519
    %v529 = vor.u32 %v527, %v528
    %v530 = vshll.u32 2102212464, %v518
    %v531 = vshrl.u32 920167782, %v519
    %v532 = vor.u32 %v530, %v531
    %v533 = vshll.u32 920167782, %v518
    %v534 = vshrl.u32 1326507024, %v519
    %v535 = vor.u32 %v533, %v534
    %vm536 = vcmp.lt.s32.totalorder %v517, 1
    %vm537 = vcmp.lt.s32.totalorder %v517, 2
    %vm538 = vcmp.lt.s32.totalorder %v517, 3
    %vm539 = vcmp.lt.s32.totalorder %v517, 4
    %v540 = vsel %vm536, %v520, %v523
    %v541 = vsel %vm539, %v529, 2102212464
    %v542 = vsel %vm538, %v526, %v541
    %v543 = vsel %vm537, %v540, %v542
    %v544 = vsel %vm536, %v523, %v526
    %v545 = vsel %vm539, %v532, 920167782
    %v546 = vsel %vm538, %v529, %v545
    %v547 = vsel %vm537, %v544, %v546
    %v548 = vsel %vm536, %v526, %v529
    %v549 = vsel %vm539, %v535, 1326507024
    %v550 = vsel %vm538, %v532, %v549
    %v551 = vsel %vm537, %v548, %v550
    %v552 = vshll.u32 %v512, 8
    %v553 = vand.u32 %v552, 65535
    %v554 = vshrl.u32 %v552, 16
    %v555 = vand.u32 %v551, 65535
    %v556 = vshrl.u32 %v551, 16
    %v557 = vmul.u32 %v553, %v555
    %v558 = vmul.u32 %v553, %v556
    %v559 = vmul.u32 %v554, %v555
    %v560 = vmul.u32 %v554, %v556
    %v561 = vshll.u32 %v558, 16
    %v562 = vshrl.u32 %v558, 16
    %v563 = vshll.u32 %v559, 16
    %v564 = vshrl.u32 %v559, 16
    %vm565 = vc.u32 %v557, %v561
    %v566 = vsel %vm565, 1, 0
    %v567 = vadd.s32 %v557, %v561
    %v568 = vadd.s32 %v560, %v566
    %vm569 = vc.u32 %v567, %v563
    %v570 = vsel %vm569, 1, 0
    %v571 = vadd.s32 %v567, %v563
    %v572 = vadd.s32 %v568, %v570
    %v573 = vadd.s32 %v572, %v562
    %v574 = vadd.s32 %v573, %v564
    %v575 = vand.u32 %v552, 65535
    %v576 = vshrl.u32 %v552, 16
    %v577 = vand.u32 %v547, 65535
    %v578 = vshrl.u32 %v547, 16
    %v579 = vmul.u32 %v575, %v577
    %v580 = vmul.u32 %v575, %v578
    %v581 = vmul.u32 %v576, %v577
    %v582 = vmul.u32 %v576, %v578
    %v583 = vshll.u32 %v580, 16
    %v584 = vshrl.u32 %v580, 16
    %v585 = vshll.u32 %v581, 16
    %v586 = vshrl.u32 %v581, 16
    %vm587 = vc.u32 %v579, %v583
    %v588 = vsel %vm587, 1, 0
    %v589 = vadd.s32 %v579, %v583
    %v590 = vadd.s32 %v582, %v588
    %vm591 = vc.u32 %v589, %v585
    %v592 = vsel %vm591, 1, 0
    %v593 = vadd.s32 %v589, %v585
    %v594 = vadd.s32 %v590, %v592
    %v595 = vadd.s32 %v594, %v584
    %v596 = vadd.s32 %v595, %v586
    %v597 = vmul.u32 %v552, %v543
    %v598 = vadd.s32 %v574, %v593
    %vm599 = vc.u32 %v574, %v593
    %v600 = vadd.s32 %v596, 1
    %v601 = vsel %vm599, %v600, %v596
    %v602 = vadd.s32 %v597, %v601
    %v603 = vadd.s32 %v602, 536870912
    %v604 = vshrl.u32 %v603, 30
    %v605 = vshll.u32 %v604, 30
    %v606 = vsub.s32 %v602, %v605
    %vm607 = vcmp.lt.s32.totalorder %v606, 0
    %v608 = vsub.s32 0, %v606
    %v609 = vsel %vm607, %v608, %v606
    %v610 = vclz %v609
    %v611 = vsub.s32 %v610, 2
    %vm612 = vcmp.gt.s32.totalorder 0, %v611
    %v613 = vsel %vm612, 0, %v611
    %v614 = vsub.s32 32, %v613
    %v615 = vshll.u32 %v606, %v613
    %v616 = vshrl.u32 %v598, %v614
    %v617 = vor.u32 %v615, %v616
    %v618 = vsub.s32 4294967266, %v613
    %v619 = vadd.s32 %v618, 127
    %v620 = vshll.u32 %v619, 23
    %v621 = vor.u32 4788187, %v620
    %v622 = vand.u32 2147483647, %v621
    %v624 = vcvt.s32.f32 %v617
    %v625 = vmul.f32 %v624, %v622
    %v626 = vxor.u32 %v625, 2147483648
    %v627 = vsel %vm506, %v626, %v625
    %v628 = vsub.s32 4, %v604
    %v629 = vsel %vm506, %v628, %v604
    %v630 = vsel %vm505, %v348, %v627
    %v631 = vsel %vm505, 0, %v629
    %v632 = vmul.f32 %v630, %v630
    %v633 = vmul.f32 %v632, -0.001358992
    %v634 = vadd.f32 %v633, 0.041655596
    %v635 = vmul.f32 %v632, %v634
    %v636 = vadd.f32 %v635, -0.4999988
    %v637 = vmul.f32 %v632, %v636
    %v638 = vadd.f32 1.0, %v637
    %v639 = vmul.f32 %v630, %v630
    %v640 = vmul.f32 %v639, -0.00019511016
    %v641 = vadd.f32 %v640, 0.008332121
    %v642 = vmul.f32 %v639, %v641
    %v643 = vadd.f32 %v642, -0.16666654
    %v644 = vmul.f32 %v639, %v643
    %v645 = vadd.f32 %v644, 1.0
    %v646 = vmul.f32 %v645, %v630
    %vm647 = vweird.f32 %v348
    %v648 = vand.u32 %v631, 3
    %vm649 = vcmp.lt.s32.totalorder %v648, 2
    %vm650 = vcmp.eq.s32.totalorder %v648, 0
    %v651 = vxor.u32 %v646, 2147483648
    %v652 = vsel %vm650, %v638, %v651
    %vm653 = vcmp.eq.s32.totalorder %v648, 2
    %v654 = vxor.u32 %v638, 2147483648
    %v655 = vsel %vm653, %v654, %v646
    %v656 = vsel %vm649, %v652, %v655
    %v657 = vsel %vm647, nan, %v656
    %s658 = scalar_lea.vmem [#allocation5], 40
    %659 = vst [vmem:[%s658] sm:$0xff] %v503
    %s660 = scalar_lea.vmem [#allocation5], 48
    %661 = vst [vmem:[%s660] sm:$0xff] %v657
    %v662 = vmul.f32 %v503, 2.0
    %v663 = vmul.f32 %v662, %v657
    %s664 = scalar_lea.vmem [#allocation5], 56
    %665 = vst [vmem:[%s664] sm:$0xff] %v663
    %v666 = vmul.f32 %v662, %v503
    %v667 = vsub.f32 1.0, %v666
    %s668 = scalar_lea.vmem [#allocation5], 64
    %669 = vst [vmem:[%s668] sm:$0xff] %v667
    %v670 = vld [vmem:[#allocation2] sm:$0xff]
    %v671 = vmul.f32 %v670, 16.0
    %v672 = vand.u32 2147483647, %v671
    %vm673 = vcmp.le.f32.partialorder %v672, 0.7853982
    %vm674 = vcmp.lt.s32.totalorder %v671, 0
    %v675 = vand.u32 %v671, 2139095040
    %v676 = vshrl.u32 %v675, 23
    %v677 = vsub.s32 %v676, 127
    %v678 = vand.u32 2147483647, %v671
    %v679 = vand.u32 %v678, 8388607
    %v680 = vor.u32 %v679, 8388608
    %v681 = vsub.s32 0, %v680
    %v682 = vadd.s32 %v677, 1
    %vm683 = vcmp.gt.s32.totalorder %v682, 0
    %v684 = vsel %vm683, %v682, 0
    %v685 = vshrl.u32 %v684, 5
    %v686 = vand.u32 %v684, 31
    %v687 = vsub.s32 32, %v686
    %v688 = vshrl.u32 683565275, %v687
    %v689 = vshll.u32 683565275, %v686
    %v690 = vshrl.u32 2475754826, %v687
    %v691 = vor.u32 %v689, %v690
    %v692 = vshll.u32 2475754826, %v686
    %v693 = vshrl.u32 2131351028, %v687
    %v694 = vor.u32 %v692, %v693
    %v695 = vshll.u32 2131351028, %v686
    %v696 = vshrl.u32 2102212464, %v687
    %v697 = vor.u32 %v695, %v696
    %v698 = vshll.u32 2102212464, %v686
    %v699 = vshrl.u32 920167782, %v687
    %v700 = vor.u32 %v698, %v699
    %v701 = vshll.u32 920167782, %v686
    %v702 = vshrl.u32 1326507024, %v687
    %v703 = vor.u32 %v701, %v702
    %vm704 = vcmp.lt.s32.totalorder %v685, 1
    %vm705 = vcmp.lt.s32.totalorder %v685, 2
    %vm706 = vcmp.lt.s32.totalorder %v685, 3
    %vm707 = vcmp.lt.s32.totalorder %v685, 4
    %v708 = vsel %vm704, %v688, %v691
    %v709 = vsel %vm707, %v697, 2102212464
    %v710 = vsel %vm706, %v694, %v709
    %v711 = vsel %vm705, %v708, %v710
    %v712 = vsel %vm704, %v691, %v694
    %v713 = vsel %vm707, %v700, 920167782
    %v714 = vsel %vm706, %v697, %v713
    %v715 = vsel %vm705, %v712, %v714
    %v716 = vsel %vm704, %v694, %v697
    %v717 = vsel %vm707, %v703, 1326507024
    %v718 = vsel %vm706, %v700, %v717
    %v719 = vsel %vm705, %v716, %v718
    %v720 = vshll.u32 %v680, 8
    %v721 = vand.u32 %v720, 65535
    %v722 = vshrl.u32 %v720, 16
    %v723 = vand.u32 %v719, 65535
    %v724 = vshrl.u32 %v719, 16
    %v725 = vmul.u32 %v721, %v723
    %v726 = vmul.u32 %v721, %v724
    %v727 = vmul.u32 %v722, %v723
    %v728 = vmul.u32 %v722, %v724
    %v729 = vshll.u32 %v726, 16
    %v730 = vshrl.u32 %v726, 16
    %v731 = vshll.u32 %v727, 16
    %v732 = vshrl.u32 %v727, 16
    %vm733 = vc.u32 %v725, %v729
    %v734 = vsel %vm733, 1, 0
    %v735 = vadd.s32 %v725, %v729
    %v736 = vadd.s32 %v728, %v734
    %vm737 = vc.u32 %v735, %v731
    %v738 = vsel %vm737, 1, 0
    %v739 = vadd.s32 %v735, %v731
    %v740 = vadd.s32 %v736, %v738
    %v741 = vadd.s32 %v740, %v730
    %v742 = vadd.s32 %v741, %v732
    %v743 = vand.u32 %v720, 65535
    %v744 = vshrl.u32 %v720, 16
    %v745 = vand.u32 %v715, 65535
    %v746 = vshrl.u32 %v715, 16
    %v747 = vmul.u32 %v743, %v745
    %v748 = vmul.u32 %v743, %v746
    %v749 = vmul.u32 %v744, %v745
    %v750 = vmul.u32 %v744, %v746
    %v751 = vshll.u32 %v748, 16
    %v752 = vshrl.u32 %v748, 16
    %v753 = vshll.u32 %v749, 16
    %v754 = vshrl.u32 %v749, 16
    %vm755 = vc.u32 %v747, %v751
    %v756 = vsel %vm755, 1, 0
    %v757 = vadd.s32 %v747, %v751
    %v758 = vadd.s32 %v750, %v756
    %vm759 = vc.u32 %v757, %v753
    %v760 = vsel %vm759, 1, 0
    %v761 = vadd.s32 %v757, %v753
    %v762 = vadd.s32 %v758, %v760
    %v763 = vadd.s32 %v762, %v752
    %v764 = vadd.s32 %v763, %v754
    %v765 = vmul.u32 %v720, %v711
    %v766 = vadd.s32 %v742, %v761
    %vm767 = vc.u32 %v742, %v761
    %v768 = vadd.s32 %v764, 1
    %v769 = vsel %vm767, %v768, %v764
    %v770 = vadd.s32 %v765, %v769
    %v771 = vadd.s32 %v770, 536870912
    %v772 = vshrl.u32 %v771, 30
    %v773 = vshll.u32 %v772, 30
    %v774 = vsub.s32 %v770, %v773
    %vm775 = vcmp.lt.s32.totalorder %v774, 0
    %v776 = vsub.s32 0, %v774
    %v777 = vsel %vm775, %v776, %v774
    %v778 = vclz %v777
    %v779 = vsub.s32 %v778, 2
    %vm780 = vcmp.gt.s32.totalorder 0, %v779
    %v781 = vsel %vm780, 0, %v779
    %v782 = vsub.s32 32, %v781
    %v783 = vshll.u32 %v774, %v781
    %v784 = vshrl.u32 %v766, %v782
    %v785 = vor.u32 %v783, %v784
    %v786 = vsub.s32 4294967266, %v781
    %v787 = vadd.s32 %v786, 127
    %v788 = vshll.u32 %v787, 23
    %v789 = vor.u32 4788187, %v788
    %v790 = vand.u32 2147483647, %v789
    %v792 = vcvt.s32.f32 %v785
    %v793 = vmul.f32 %v792, %v790
    %v794 = vxor.u32 %v793, 2147483648
    %v795 = vsel %vm674, %v794, %v793
    %v796 = vsub.s32 4, %v772
    %v797 = vsel %vm674, %v796, %v772
    %v798 = vsel %vm673, %v671, %v795
    %v799 = vsel %vm673, 0, %v797
    %v800 = vmul.f32 %v798, %v798
    %v801 = vmul.f32 %v800, -0.001358992
    %v802 = vadd.f32 %v801, 0.041655596
    %v803 = vmul.f32 %v800, %v802
    %v804 = vadd.f32 %v803, -0.4999988
    %v805 = vmul.f32 %v800, %v804
    %v806 = vadd.f32 1.0, %v805
    %v807 = vmul.f32 %v798, %v798
    %v808 = vmul.f32 %v807, -0.00019511016
    %v809 = vadd.f32 %v808, 0.008332121
    %v810 = vmul.f32 %v807, %v809
    %v811 = vadd.f32 %v810, -0.16666654
    %v812 = vmul.f32 %v807, %v811
    %v813 = vadd.f32 %v812, 1.0
    %v814 = vmul.f32 %v813, %v798
    %vm815 = vweird.f32 %v671
    %v816 = vadd.s32 %v799, 3
    %v817 = vand.u32 %v816, 3
    %vm818 = vcmp.lt.s32.totalorder %v817, 2
    %vm819 = vcmp.eq.s32.totalorder %v817, 0
    %v820 = vxor.u32 %v814, 2147483648
    %v821 = vsel %vm819, %v806, %v820
    %vm822 = vcmp.eq.s32.totalorder %v817, 2
    %v823 = vxor.u32 %v806, 2147483648
    %v824 = vsel %vm822, %v823, %v814
    %v825 = vsel %vm818, %v821, %v824
    %v826 = vsel %vm815, nan, %v825
    %v827 = vand.u32 2147483647, %v671
    %vm828 = vcmp.le.f32.partialorder %v827, 0.7853982
    %vm829 = vcmp.lt.s32.totalorder %v671, 0
    %v830 = vand.u32 %v671, 2139095040
    %v831 = vshrl.u32 %v830, 23
    %v832 = vsub.s32 %v831, 127
    %v833 = vand.u32 2147483647, %v671
    %v834 = vand.u32 %v833, 8388607
    %v835 = vor.u32 %v834, 8388608
    %v836 = vsub.s32 0, %v835
    %v837 = vadd.s32 %v832, 1
    %vm838 = vcmp.gt.s32.totalorder %v837, 0
    %v839 = vsel %vm838, %v837, 0
    %v840 = vshrl.u32 %v839, 5
    %v841 = vand.u32 %v839, 31
    %v842 = vsub.s32 32, %v841
    %v843 = vshrl.u32 683565275, %v842
    %v844 = vshll.u32 683565275, %v841
    %v845 = vshrl.u32 2475754826, %v842
    %v846 = vor.u32 %v844, %v845
    %v847 = vshll.u32 2475754826, %v841
    %v848 = vshrl.u32 2131351028, %v842
    %v849 = vor.u32 %v847, %v848
    %v850 = vshll.u32 2131351028, %v841
    %v851 = vshrl.u32 2102212464, %v842
    %v852 = vor.u32 %v850, %v851
    %v853 = vshll.u32 2102212464, %v841
    %v854 = vshrl.u32 920167782, %v842
    %v855 = vor.u32 %v853, %v854
    %v856 = vshll.u32 920167782, %v841
    %v857 = vshrl.u32 1326507024, %v842
    %v858 = vor.u32 %v856, %v857
    %vm859 = vcmp.lt.s32.totalorder %v840, 1
    %vm860 = vcmp.lt.s32.totalorder %v840, 2
    %vm861 = vcmp.lt.s32.totalorder %v840, 3
    %vm862 = vcmp.lt.s32.totalorder %v840, 4
    %v863 = vsel %vm859, %v843, %v846
    %v864 = vsel %vm862, %v852, 2102212464
    %v865 = vsel %vm861, %v849, %v864
    %v866 = vsel %vm860, %v863, %v865
    %v867 = vsel %vm859, %v846, %v849
    %v868 = vsel %vm862, %v855, 920167782
    %v869 = vsel %vm861, %v852, %v868
    %v870 = vsel %vm860, %v867, %v869
    %v871 = vsel %vm859, %v849, %v852
    %v872 = vsel %vm862, %v858, 1326507024
    %v873 = vsel %vm861, %v855, %v872
    %v874 = vsel %vm860, %v871, %v873
    %v875 = vshll.u32 %v835, 8
    %v876 = vand.u32 %v875, 65535
    %v877 = vshrl.u32 %v875, 16
    %v878 = vand.u32 %v874, 65535
    %v879 = vshrl.u32 %v874, 16
    %v880 = vmul.u32 %v876, %v878
    %v881 = vmul.u32 %v876, %v879
    %v882 = vmul.u32 %v877, %v878
    %v883 = vmul.u32 %v877, %v879
    %v884 = vshll.u32 %v881, 16
    %v885 = vshrl.u32 %v881, 16
    %v886 = vshll.u32 %v882, 16
    %v887 = vshrl.u32 %v882, 16
    %vm888 = vc.u32 %v880, %v884
    %v889 = vsel %vm888, 1, 0
    %v890 = vadd.s32 %v880, %v884
    %v891 = vadd.s32 %v883, %v889
    %vm892 = vc.u32 %v890, %v886
    %v893 = vsel %vm892, 1, 0
    %v894 = vadd.s32 %v890, %v886
    %v895 = vadd.s32 %v891, %v893
    %v896 = vadd.s32 %v895, %v885
    %v897 = vadd.s32 %v896, %v887
    %v898 = vand.u32 %v875, 65535
    %v899 = vshrl.u32 %v875, 16
    %v900 = vand.u32 %v870, 65535
    %v901 = vshrl.u32 %v870, 16
    %v902 = vmul.u32 %v898, %v900
    %v903 = vmul.u32 %v898, %v901
    %v904 = vmul.u32 %v899, %v900
    %v905 = vmul.u32 %v899, %v901
    %v906 = vshll.u32 %v903, 16
    %v907 = vshrl.u32 %v903, 16
    %v908 = vshll.u32 %v904, 16
    %v909 = vshrl.u32 %v904, 16
    %vm910 = vc.u32 %v902, %v906
    %v911 = vsel %vm910, 1, 0
    %v912 = vadd.s32 %v902, %v906
    %v913 = vadd.s32 %v905, %v911
    %vm914 = vc.u32 %v912, %v908
    %v915 = vsel %vm914, 1, 0
    %v916 = vadd.s32 %v912, %v908
    %v917 = vadd.s32 %v913, %v915
    %v918 = vadd.s32 %v917, %v907
    %v919 = vadd.s32 %v918, %v909
    %v920 = vmul.u32 %v875, %v866
    %v921 = vadd.s32 %v897, %v916
    %vm922 = vc.u32 %v897, %v916
    %v923 = vadd.s32 %v919, 1
    %v924 = vsel %vm922, %v923, %v919
    %v925 = vadd.s32 %v920, %v924
    %v926 = vadd.s32 %v925, 536870912
    %v927 = vshrl.u32 %v926, 30
    %v928 = vshll.u32 %v927, 30
    %v929 = vsub.s32 %v925, %v928
    %vm930 = vcmp.lt.s32.totalorder %v929, 0
    %v931 = vsub.s32 0, %v929
    %v932 = vsel %vm930, %v931, %v929
    %v933 = vclz %v932
    %v934 = vsub.s32 %v933, 2
    %vm935 = vcmp.gt.s32.totalorder 0, %v934
    %v936 = vsel %vm935, 0, %v934
    %v937 = vsub.s32 32, %v936
    %v938 = vshll.u32 %v929, %v936
    %v939 = vshrl.u32 %v921, %v937
    %v940 = vor.u32 %v938, %v939
    %v941 = vsub.s32 4294967266, %v936
    %v942 = vadd.s32 %v941, 127
    %v943 = vshll.u32 %v942, 23
    %v944 = vor.u32 4788187, %v943
    %v945 = vand.u32 2147483647, %v944
    %v947 = vcvt.s32.f32 %v940
    %v948 = vmul.f32 %v947, %v945
    %v949 = vxor.u32 %v948, 2147483648
    %v950 = vsel %vm829, %v949, %v948
    %v951 = vsub.s32 4, %v927
    %v952 = vsel %vm829, %v951, %v927
    %v953 = vsel %vm828, %v671, %v950
    %v954 = vsel %vm828, 0, %v952
    %v955 = vmul.f32 %v953, %v953
    %v956 = vmul.f32 %v955, -0.001358992
    %v957 = vadd.f32 %v956, 0.041655596
    %v958 = vmul.f32 %v955, %v957
    %v959 = vadd.f32 %v958, -0.4999988
    %v960 = vmul.f32 %v955, %v959
    %v961 = vadd.f32 1.0, %v960
    %v962 = vmul.f32 %v953, %v953
    %v963 = vmul.f32 %v962, -0.00019511016
    %v964 = vadd.f32 %v963, 0.008332121
    %v965 = vmul.f32 %v962, %v964
    %v966 = vadd.f32 %v965, -0.16666654
    %v967 = vmul.f32 %v962, %v966
    %v968 = vadd.f32 %v967, 1.0
    %v969 = vmul.f32 %v968, %v953
    %vm970 = vweird.f32 %v671
    %v971 = vand.u32 %v954, 3
    %vm972 = vcmp.lt.s32.totalorder %v971, 2
    %vm973 = vcmp.eq.s32.totalorder %v971, 0
    %v974 = vxor.u32 %v969, 2147483648
    %v975 = vsel %vm973, %v961, %v974
    %vm976 = vcmp.eq.s32.totalorder %v971, 2
    %v977 = vxor.u32 %v961, 2147483648
    %v978 = vsel %vm976, %v977, %v969
    %v979 = vsel %vm972, %v975, %v978
    %v980 = vsel %vm970, nan, %v979
    %s981 = scalar_lea.vmem [#allocation5], 72
    %982 = vst [vmem:[%s981] sm:$0xff] %v826
    %s983 = scalar_lea.vmem [#allocation5], 80
    %984 = vst [vmem:[%s983] sm:$0xff] %v980
    %v985 = vmul.f32 %v826, 2.0
    %v986 = vmul.f32 %v985, %v980
    %s987 = scalar_lea.vmem [#allocation5], 88
    %988 = vst [vmem:[%s987] sm:$0xff] %v986
    %v989 = vmul.f32 %v985, %v826
    %v990 = vsub.f32 1.0, %v989
    %s991 = scalar_lea.vmem [#allocation5], 96
    %992 = vst [vmem:[%s991] sm:$0xff] %v990
    %v993 = vld [vmem:[#allocation2] sm:$0xff]
    %v994 = vmul.f32 %v993, 64.0
    %v995 = vand.u32 2147483647, %v994
    %vm996 = vcmp.le.f32.partialorder %v995, 0.7853982
    %vm997 = vcmp.lt.s32.totalorder %v994, 0
    %v998 = vand.u32 %v994, 2139095040
    %v999 = vshrl.u32 %v998, 23
    %v1000 = vsub.s32 %v999, 127
    %v1001 = vand.u32 2147483647, %v994
    %v1002 = vand.u32 %v1001, 8388607
    %v1003 = vor.u32 %v1002, 8388608
    %v1004 = vsub.s32 0, %v1003
    %v1005 = vadd.s32 %v1000, 1
    %vm1006 = vcmp.gt.s32.totalorder %v1005, 0
    %v1007 = vsel %vm1006, %v1005, 0
    %v1008 = vshrl.u32 %v1007, 5
    %v1009 = vand.u32 %v1007, 31
    %v1010 = vsub.s32 32, %v1009
    %v1011 = vshrl.u32 683565275, %v1010
    %v1012 = vshll.u32 683565275, %v1009
    %v1013 = vshrl.u32 2475754826, %v1010
    %v1014 = vor.u32 %v1012, %v1013
    %v1015 = vshll.u32 2475754826, %v1009
    %v1016 = vshrl.u32 2131351028, %v1010
    %v1017 = vor.u32 %v1015, %v1016
    %v1018 = vshll.u32 2131351028, %v1009
    %v1019 = vshrl.u32 2102212464, %v1010
    %v1020 = vor.u32 %v1018, %v1019
    %v1021 = vshll.u32 2102212464, %v1009
    %v1022 = vshrl.u32 920167782, %v1010
    %v1023 = vor.u32 %v1021, %v1022
    %v1024 = vshll.u32 920167782, %v1009
    %v1025 = vshrl.u32 1326507024, %v1010
    %v1026 = vor.u32 %v1024, %v1025
    %vm1027 = vcmp.lt.s32.totalorder %v1008, 1
    %vm1028 = vcmp.lt.s32.totalorder %v1008, 2
    %vm1029 = vcmp.lt.s32.totalorder %v1008, 3
    %vm1030 = vcmp.lt.s32.totalorder %v1008, 4
    %v1031 = vsel %vm1027, %v1011, %v1014
    %v1032 = vsel %vm1030, %v1020, 2102212464
    %v1033 = vsel %vm1029, %v1017, %v1032
    %v1034 = vsel %vm1028, %v1031, %v1033
    %v1035 = vsel %vm1027, %v1014, %v1017
    %v1036 = vsel %vm1030, %v1023, 920167782
    %v1037 = vsel %vm1029, %v1020, %v1036
    %v1038 = vsel %vm1028, %v1035, %v1037
    %v1039 = vsel %vm1027, %v1017, %v1020
    %v1040 = vsel %vm1030, %v1026, 1326507024
    %v1041 = vsel %vm1029, %v1023, %v1040
    %v1042 = vsel %vm1028, %v1039, %v1041
    %v1043 = vshll.u32 %v1003, 8
    %v1044 = vand.u32 %v1043, 65535
    %v1045 = vshrl.u32 %v1043, 16
    %v1046 = vand.u32 %v1042, 65535
    %v1047 = vshrl.u32 %v1042, 16
    %v1048 = vmul.u32 %v1044, %v1046
    %v1049 = vmul.u32 %v1044, %v1047
    %v1050 = vmul.u32 %v1045, %v1046
    %v1051 = vmul.u32 %v1045, %v1047
    %v1052 = vshll.u32 %v1049, 16
    %v1053 = vshrl.u32 %v1049, 16
    %v1054 = vshll.u32 %v1050, 16
    %v1055 = vshrl.u32 %v1050, 16
    %vm1056 = vc.u32 %v1048, %v1052
    %v1057 = vsel %vm1056, 1, 0
    %v1058 = vadd.s32 %v1048, %v1052
    %v1059 = vadd.s32 %v1051, %v1057
    %vm1060 = vc.u32 %v1058, %v1054
    %v1061 = vsel %vm1060, 1, 0
    %v1062 = vadd.s32 %v1058, %v1054
    %v1063 = vadd.s32 %v1059, %v1061
    %v1064 = vadd.s32 %v1063, %v1053
    %v1065 = vadd.s32 %v1064, %v1055
    %v1066 = vand.u32 %v1043, 65535
    %v1067 = vshrl.u32 %v1043, 16
    %v1068 = vand.u32 %v1038, 65535
    %v1069 = vshrl.u32 %v1038, 16
    %v1070 = vmul.u32 %v1066, %v1068
    %v1071 = vmul.u32 %v1066, %v1069
    %v1072 = vmul.u32 %v1067, %v1068
    %v1073 = vmul.u32 %v1067, %v1069
    %v1074 = vshll.u32 %v1071, 16
    %v1075 = vshrl.u32 %v1071, 16
    %v1076 = vshll.u32 %v1072, 16
    %v1077 = vshrl.u32 %v1072, 16
    %vm1078 = vc.u32 %v1070, %v1074
    %v1079 = vsel %vm1078, 1, 0
    %v1080 = vadd.s32 %v1070, %v1074
    %v1081 = vadd.s32 %v1073, %v1079
    %vm1082 = vc.u32 %v1080, %v1076
    %v1083 = vsel %vm1082, 1, 0
    %v1084 = vadd.s32 %v1080, %v1076
    %v1085 = vadd.s32 %v1081, %v1083
    %v1086 = vadd.s32 %v1085, %v1075
    %v1087 = vadd.s32 %v1086, %v1077
    %v1088 = vmul.u32 %v1043, %v1034
    %v1089 = vadd.s32 %v1065, %v1084
    %vm1090 = vc.u32 %v1065, %v1084
    %v1091 = vadd.s32 %v1087, 1
    %v1092 = vsel %vm1090, %v1091, %v1087
    %v1093 = vadd.s32 %v1088, %v1092
    %v1094 = vadd.s32 %v1093, 536870912
    %v1095 = vshrl.u32 %v1094, 30
    %v1096 = vshll.u32 %v1095, 30
    %v1097 = vsub.s32 %v1093, %v1096
    %vm1098 = vcmp.lt.s32.totalorder %v1097, 0
    %v1099 = vsub.s32 0, %v1097
    %v1100 = vsel %vm1098, %v1099, %v1097
    %v1101 = vclz %v1100
    %v1102 = vsub.s32 %v1101, 2
    %vm1103 = vcmp.gt.s32.totalorder 0, %v1102
    %v1104 = vsel %vm1103, 0, %v1102
    %v1105 = vsub.s32 32, %v1104
    %v1106 = vshll.u32 %v1097, %v1104
    %v1107 = vshrl.u32 %v1089, %v1105
    %v1108 = vor.u32 %v1106, %v1107
    %v1109 = vsub.s32 4294967266, %v1104
    %v1110 = vadd.s32 %v1109, 127
    %v1111 = vshll.u32 %v1110, 23
    %v1112 = vor.u32 4788187, %v1111
    %v1113 = vand.u32 2147483647, %v1112
    %v1115 = vcvt.s32.f32 %v1108
    %v1116 = vmul.f32 %v1115, %v1113
    %v1117 = vxor.u32 %v1116, 2147483648
    %v1118 = vsel %vm997, %v1117, %v1116
    %v1119 = vsub.s32 4, %v1095
    %v1120 = vsel %vm997, %v1119, %v1095
    %v1121 = vsel %vm996, %v994, %v1118
    %v1122 = vsel %vm996, 0, %v1120
    %v1123 = vmul.f32 %v1121, %v1121
    %v1124 = vmul.f32 %v1123, -0.001358992
    %v1125 = vadd.f32 %v1124, 0.041655596
    %v1126 = vmul.f32 %v1123, %v1125
    %v1127 = vadd.f32 %v1126, -0.4999988
    %v1128 = vmul.f32 %v1123, %v1127
    %v1129 = vadd.f32 1.0, %v1128
    %v1130 = vmul.f32 %v1121, %v1121
    %v1131 = vmul.f32 %v1130, -0.00019511016
    %v1132 = vadd.f32 %v1131, 0.008332121
    %v1133 = vmul.f32 %v1130, %v1132
    %v1134 = vadd.f32 %v1133, -0.16666654
    %v1135 = vmul.f32 %v1130, %v1134
    %v1136 = vadd.f32 %v1135, 1.0
    %v1137 = vmul.f32 %v1136, %v1121
    %vm1138 = vweird.f32 %v994
    %v1139 = vadd.s32 %v1122, 3
    %v1140 = vand.u32 %v1139, 3
    %vm1141 = vcmp.lt.s32.totalorder %v1140, 2
    %vm1142 = vcmp.eq.s32.totalorder %v1140, 0
    %v1143 = vxor.u32 %v1137, 2147483648
    %v1144 = vsel %vm1142, %v1129, %v1143
    %vm1145 = vcmp.eq.s32.totalorder %v1140, 2
    %v1146 = vxor.u32 %v1129, 2147483648
    %v1147 = vsel %vm1145, %v1146, %v1137
    %v1148 = vsel %vm1141, %v1144, %v1147
    %v1149 = vsel %vm1138, nan, %v1148
    %v1150 = vand.u32 2147483647, %v994
    %vm1151 = vcmp.le.f32.partialorder %v1150, 0.7853982
    %vm1152 = vcmp.lt.s32.totalorder %v994, 0
    %v1153 = vand.u32 %v994, 2139095040
    %v1154 = vshrl.u32 %v1153, 23
    %v1155 = vsub.s32 %v1154, 127
    %v1156 = vand.u32 2147483647, %v994
    %v1157 = vand.u32 %v1156, 8388607
    %v1158 = vor.u32 %v1157, 8388608
    %v1159 = vsub.s32 0, %v1158
    %v1160 = vadd.s32 %v1155, 1
    %vm1161 = vcmp.gt.s32.totalorder %v1160, 0
    %v1162 = vsel %vm1161, %v1160, 0
    %v1163 = vshrl.u32 %v1162, 5
    %v1164 = vand.u32 %v1162, 31
    %v1165 = vsub.s32 32, %v1164
    %v1166 = vshrl.u32 683565275, %v1165
    %v1167 = vshll.u32 683565275, %v1164
    %v1168 = vshrl.u32 2475754826, %v1165
    %v1169 = vor.u32 %v1167, %v1168
    %v1170 = vshll.u32 2475754826, %v1164
    %v1171 = vshrl.u32 2131351028, %v1165
    %v1172 = vor.u32 %v1170, %v1171
    %v1173 = vshll.u32 2131351028, %v1164
    %v1174 = vshrl.u32 2102212464, %v1165
    %v1175 = vor.u32 %v1173, %v1174
    %v1176 = vshll.u32 2102212464, %v1164
    %v1177 = vshrl.u32 920167782, %v1165
    %v1178 = vor.u32 %v1176, %v1177
    %v1179 = vshll.u32 920167782, %v1164
    %v1180 = vshrl.u32 1326507024, %v1165
    %v1181 = vor.u32 %v1179, %v1180
    %vm1182 = vcmp.lt.s32.totalorder %v1163, 1
    %vm1183 = vcmp.lt.s32.totalorder %v1163, 2
    %vm1184 = vcmp.lt.s32.totalorder %v1163, 3
    %vm1185 = vcmp.lt.s32.totalorder %v1163, 4
    %v1186 = vsel %vm1182, %v1166, %v1169
    %v1187 = vsel %vm1185, %v1175, 2102212464
    %v1188 = vsel %vm1184, %v1172, %v1187
    %v1189 = vsel %vm1183, %v1186, %v1188
    %v1190 = vsel %vm1182, %v1169, %v1172
    %v1191 = vsel %vm1185, %v1178, 920167782
    %v1192 = vsel %vm1184, %v1175, %v1191
    %v1193 = vsel %vm1183, %v1190, %v1192
    %v1194 = vsel %vm1182, %v1172, %v1175
    %v1195 = vsel %vm1185, %v1181, 1326507024
    %v1196 = vsel %vm1184, %v1178, %v1195
    %v1197 = vsel %vm1183, %v1194, %v1196
    %v1198 = vshll.u32 %v1158, 8
    %v1199 = vand.u32 %v1198, 65535
    %v1200 = vshrl.u32 %v1198, 16
    %v1201 = vand.u32 %v1197, 65535
    %v1202 = vshrl.u32 %v1197, 16
    %v1203 = vmul.u32 %v1199, %v1201
    %v1204 = vmul.u32 %v1199, %v1202
    %v1205 = vmul.u32 %v1200, %v1201
    %v1206 = vmul.u32 %v1200, %v1202
    %v1207 = vshll.u32 %v1204, 16
    %v1208 = vshrl.u32 %v1204, 16
    %v1209 = vshll.u32 %v1205, 16
    %v1210 = vshrl.u32 %v1205, 16
    %vm1211 = vc.u32 %v1203, %v1207
    %v1212 = vsel %vm1211, 1, 0
    %v1213 = vadd.s32 %v1203, %v1207
    %v1214 = vadd.s32 %v1206, %v1212
    %vm1215 = vc.u32 %v1213, %v1209
    %v1216 = vsel %vm1215, 1, 0
    %v1217 = vadd.s32 %v1213, %v1209
    %v1218 = vadd.s32 %v1214, %v1216
    %v1219 = vadd.s32 %v1218, %v1208
    %v1220 = vadd.s32 %v1219, %v1210
    %v1221 = vand.u32 %v1198, 65535
    %v1222 = vshrl.u32 %v1198, 16
    %v1223 = vand.u32 %v1193, 65535
    %v1224 = vshrl.u32 %v1193, 16
    %v1225 = vmul.u32 %v1221, %v1223
    %v1226 = vmul.u32 %v1221, %v1224
    %v1227 = vmul.u32 %v1222, %v1223
    %v1228 = vmul.u32 %v1222, %v1224
    %v1229 = vshll.u32 %v1226, 16
    %v1230 = vshrl.u32 %v1226, 16
    %v1231 = vshll.u32 %v1227, 16
    %v1232 = vshrl.u32 %v1227, 16
    %vm1233 = vc.u32 %v1225, %v1229
    %v1234 = vsel %vm1233, 1, 0
    %v1235 = vadd.s32 %v1225, %v1229
    %v1236 = vadd.s32 %v1228, %v1234
    %vm1237 = vc.u32 %v1235, %v1231
    %v1238 = vsel %vm1237, 1, 0
    %v1239 = vadd.s32 %v1235, %v1231
    %v1240 = vadd.s32 %v1236, %v1238
    %v1241 = vadd.s32 %v1240, %v1230
    %v1242 = vadd.s32 %v1241, %v1232
    %v1243 = vmul.u32 %v1198, %v1189
    %v1244 = vadd.s32 %v1220, %v1239
    %vm1245 = vc.u32 %v1220, %v1239
    %v1246 = vadd.s32 %v1242, 1
    %v1247 = vsel %vm1245, %v1246, %v1242
    %v1248 = vadd.s32 %v1243, %v1247
    %v1249 = vadd.s32 %v1248, 536870912
    %v1250 = vshrl.u32 %v1249, 30
    %v1251 = vshll.u32 %v1250, 30
    %v1252 = vsub.s32 %v1248, %v1251
    %vm1253 = vcmp.lt.s32.totalorder %v1252, 0
    %v1254 = vsub.s32 0, %v1252
    %v1255 = vsel %vm1253, %v1254, %v1252
    %v1256 = vclz %v1255
    %v1257 = vsub.s32 %v1256, 2
    %vm1258 = vcmp.gt.s32.totalorder 0, %v1257
    %v1259 = vsel %vm1258, 0, %v1257
    %v1260 = vsub.s32 32, %v1259
    %v1261 = vshll.u32 %v1252, %v1259
    %v1262 = vshrl.u32 %v1244, %v1260
    %v1263 = vor.u32 %v1261, %v1262
    %v1264 = vsub.s32 4294967266, %v1259
    %v1265 = vadd.s32 %v1264, 127
    %v1266 = vshll.u32 %v1265, 23
    %v1267 = vor.u32 4788187, %v1266
    %v1268 = vand.u32 2147483647, %v1267
    %v1270 = vcvt.s32.f32 %v1263
    %v1271 = vmul.f32 %v1270, %v1268
    %v1272 = vxor.u32 %v1271, 2147483648
    %v1273 = vsel %vm1152, %v1272, %v1271
    %v1274 = vsub.s32 4, %v1250
    %v1275 = vsel %vm1152, %v1274, %v1250
    %v1276 = vsel %vm1151, %v994, %v1273
    %v1277 = vsel %vm1151, 0, %v1275
    %v1278 = vmul.f32 %v1276, %v1276
    %v1279 = vmul.f32 %v1278, -0.001358992
    %v1280 = vadd.f32 %v1279, 0.041655596
    %v1281 = vmul.f32 %v1278, %v1280
    %v1282 = vadd.f32 %v1281, -0.4999988
    %v1283 = vmul.f32 %v1278, %v1282
    %v1284 = vadd.f32 1.0, %v1283
    %v1285 = vmul.f32 %v1276, %v1276
    %v1286 = vmul.f32 %v1285, -0.00019511016
    %v1287 = vadd.f32 %v1286, 0.008332121
    %v1288 = vmul.f32 %v1285, %v1287
    %v1289 = vadd.f32 %v1288, -0.16666654
    %v1290 = vmul.f32 %v1285, %v1289
    %v1291 = vadd.f32 %v1290, 1.0
    %v1292 = vmul.f32 %v1291, %v1276
    %vm1293 = vweird.f32 %v994
    %v1294 = vand.u32 %v1277, 3
    %vm1295 = vcmp.lt.s32.totalorder %v1294, 2
    %vm1296 = vcmp.eq.s32.totalorder %v1294, 0
    %v1297 = vxor.u32 %v1292, 2147483648
    %v1298 = vsel %vm1296, %v1284, %v1297
    %vm1299 = vcmp.eq.s32.totalorder %v1294, 2
    %v1300 = vxor.u32 %v1284, 2147483648
    %v1301 = vsel %vm1299, %v1300, %v1292
    %v1302 = vsel %vm1295, %v1298, %v1301
    %v1303 = vsel %vm1293, nan, %v1302
    %s1304 = scalar_lea.vmem [#allocation5], 104
    %1305 = vst [vmem:[%s1304] sm:$0xff] %v1149
    %s1306 = scalar_lea.vmem [#allocation5], 112
    %1307 = vst [vmem:[%s1306] sm:$0xff] %v1303
    %v1308 = vmul.f32 %v1149, 2.0
    %v1309 = vmul.f32 %v1308, %v1303
    %s1310 = scalar_lea.vmem [#allocation5], 120
    %1311 = vst [vmem:[%s1310] sm:$0xff] %v1309
    %v1312 = vmul.f32 %v1308, %v1149
    %v1313 = vsub.f32 1.0, %v1312
    %s1314 = scalar_lea.vmem [#allocation5], 128
    %1315 = vst [vmem:[%s1314] sm:$0xff] %v1313
    %v1316 = vld [vmem:[#allocation2] sm:$0xff]
    %v1317 = vmul.f32 %v1316, 256.0
    %v1318 = vand.u32 2147483647, %v1317
    %vm1319 = vcmp.le.f32.partialorder %v1318, 0.7853982
    %vm1320 = vcmp.lt.s32.totalorder %v1317, 0
    %v1321 = vand.u32 %v1317, 2139095040
    %v1322 = vshrl.u32 %v1321, 23
    %v1323 = vsub.s32 %v1322, 127
    %v1324 = vand.u32 2147483647, %v1317
    %v1325 = vand.u32 %v1324, 8388607
    %v1326 = vor.u32 %v1325, 8388608
    %v1327 = vsub.s32 0, %v1326
    %v1328 = vadd.s32 %v1323, 1
    %vm1329 = vcmp.gt.s32.totalorder %v1328, 0
    %v1330 = vsel %vm1329, %v1328, 0
    %v1331 = vshrl.u32 %v1330, 5
    %v1332 = vand.u32 %v1330, 31
    %v1333 = vsub.s32 32, %v1332
    %v1334 = vshrl.u32 683565275, %v1333
    %v1335 = vshll.u32 683565275, %v1332
    %v1336 = vshrl.u32 2475754826, %v1333
    %v1337 = vor.u32 %v1335, %v1336
    %v1338 = vshll.u32 2475754826, %v1332
    %v1339 = vshrl.u32 2131351028, %v1333
    %v1340 = vor.u32 %v1338, %v1339
    %v1341 = vshll.u32 2131351028, %v1332
    %v1342 = vshrl.u32 2102212464, %v1333
    %v1343 = vor.u32 %v1341, %v1342
    %v1344 = vshll.u32 2102212464, %v1332
    %v1345 = vshrl.u32 920167782, %v1333
    %v1346 = vor.u32 %v1344, %v1345
    %v1347 = vshll.u32 920167782, %v1332
    %v1348 = vshrl.u32 1326507024, %v1333
    %v1349 = vor.u32 %v1347, %v1348
    %vm1350 = vcmp.lt.s32.totalorder %v1331, 1
    %vm1351 = vcmp.lt.s32.totalorder %v1331, 2
    %vm1352 = vcmp.lt.s32.totalorder %v1331, 3
    %vm1353 = vcmp.lt.s32.totalorder %v1331, 4
    %v1354 = vsel %vm1350, %v1334, %v1337
    %v1355 = vsel %vm1353, %v1343, 2102212464
    %v1356 = vsel %vm1352, %v1340, %v1355
    %v1357 = vsel %vm1351, %v1354, %v1356
    %v1358 = vsel %vm1350, %v1337, %v1340
    %v1359 = vsel %vm1353, %v1346, 920167782
    %v1360 = vsel %vm1352, %v1343, %v1359
    %v1361 = vsel %vm1351, %v1358, %v1360
    %v1362 = vsel %vm1350, %v1340, %v1343
    %v1363 = vsel %vm1353, %v1349, 1326507024
    %v1364 = vsel %vm1352, %v1346, %v1363
    %v1365 = vsel %vm1351, %v1362, %v1364
    %v1366 = vshll.u32 %v1326, 8
    %v1367 = vand.u32 %v1366, 65535
    %v1368 = vshrl.u32 %v1366, 16
    %v1369 = vand.u32 %v1365, 65535
    %v1370 = vshrl.u32 %v1365, 16
    %v1371 = vmul.u32 %v1367, %v1369
    %v1372 = vmul.u32 %v1367, %v1370
    %v1373 = vmul.u32 %v1368, %v1369
    %v1374 = vmul.u32 %v1368, %v1370
    %v1375 = vshll.u32 %v1372, 16
    %v1376 = vshrl.u32 %v1372, 16
    %v1377 = vshll.u32 %v1373, 16
    %v1378 = vshrl.u32 %v1373, 16
    %vm1379 = vc.u32 %v1371, %v1375
    %v1380 = vsel %vm1379, 1, 0
    %v1381 = vadd.s32 %v1371, %v1375
    %v1382 = vadd.s32 %v1374, %v1380
    %vm1383 = vc.u32 %v1381, %v1377
    %v1384 = vsel %vm1383, 1, 0
    %v1385 = vadd.s32 %v1381, %v1377
    %v1386 = vadd.s32 %v1382, %v1384
    %v1387 = vadd.s32 %v1386, %v1376
    %v1388 = vadd.s32 %v1387, %v1378
    %v1389 = vand.u32 %v1366, 65535
    %v1390 = vshrl.u32 %v1366, 16
    %v1391 = vand.u32 %v1361, 65535
    %v1392 = vshrl.u32 %v1361, 16
    %v1393 = vmul.u32 %v1389, %v1391
    %v1394 = vmul.u32 %v1389, %v1392
    %v1395 = vmul.u32 %v1390, %v1391
    %v1396 = vmul.u32 %v1390, %v1392
    %v1397 = vshll.u32 %v1394, 16
    %v1398 = vshrl.u32 %v1394, 16
    %v1399 = vshll.u32 %v1395, 16
    %v1400 = vshrl.u32 %v1395, 16
    %vm1401 = vc.u32 %v1393, %v1397
    %v1402 = vsel %vm1401, 1, 0
    %v1403 = vadd.s32 %v1393, %v1397
    %v1404 = vadd.s32 %v1396, %v1402
    %vm1405 = vc.u32 %v1403, %v1399
    %v1406 = vsel %vm1405, 1, 0
    %v1407 = vadd.s32 %v1403, %v1399
    %v1408 = vadd.s32 %v1404, %v1406
    %v1409 = vadd.s32 %v1408, %v1398
    %v1410 = vadd.s32 %v1409, %v1400
    %v1411 = vmul.u32 %v1366, %v1357
    %v1412 = vadd.s32 %v1388, %v1407
    %vm1413 = vc.u32 %v1388, %v1407
    %v1414 = vadd.s32 %v1410, 1
    %v1415 = vsel %vm1413, %v1414, %v1410
    %v1416 = vadd.s32 %v1411, %v1415
    %v1417 = vadd.s32 %v1416, 536870912
    %v1418 = vshrl.u32 %v1417, 30
    %v1419 = vshll.u32 %v1418, 30
    %v1420 = vsub.s32 %v1416, %v1419
    %vm1421 = vcmp.lt.s32.totalorder %v1420, 0
    %v1422 = vsub.s32 0, %v1420
    %v1423 = vsel %vm1421, %v1422, %v1420
    %v1424 = vclz %v1423
    %v1425 = vsub.s32 %v1424, 2
    %vm1426 = vcmp.gt.s32.totalorder 0, %v1425
    %v1427 = vsel %vm1426, 0, %v1425
    %v1428 = vsub.s32 32, %v1427
    %v1429 = vshll.u32 %v1420, %v1427
    %v1430 = vshrl.u32 %v1412, %v1428
    %v1431 = vor.u32 %v1429, %v1430
    %v1432 = vsub.s32 4294967266, %v1427
    %v1433 = vadd.s32 %v1432, 127
    %v1434 = vshll.u32 %v1433, 23
    %v1435 = vor.u32 4788187, %v1434
    %v1436 = vand.u32 2147483647, %v1435
    %v1438 = vcvt.s32.f32 %v1431
    %v1439 = vmul.f32 %v1438, %v1436
    %v1440 = vxor.u32 %v1439, 2147483648
    %v1441 = vsel %vm1320, %v1440, %v1439
    %v1442 = vsub.s32 4, %v1418
    %v1443 = vsel %vm1320, %v1442, %v1418
    %v1444 = vsel %vm1319, %v1317, %v1441
    %v1445 = vsel %vm1319, 0, %v1443
    %v1446 = vmul.f32 %v1444, %v1444
    %v1447 = vmul.f32 %v1446, -0.001358992
    %v1448 = vadd.f32 %v1447, 0.041655596
    %v1449 = vmul.f32 %v1446, %v1448
    %v1450 = vadd.f32 %v1449, -0.4999988
    %v1451 = vmul.f32 %v1446, %v1450
    %v1452 = vadd.f32 1.0, %v1451
    %v1453 = vmul.f32 %v1444, %v1444
    %v1454 = vmul.f32 %v1453, -0.00019511016
    %v1455 = vadd.f32 %v1454, 0.008332121
    %v1456 = vmul.f32 %v1453, %v1455
    %v1457 = vadd.f32 %v1456, -0.16666654
    %v1458 = vmul.f32 %v1453, %v1457
    %v1459 = vadd.f32 %v1458, 1.0
    %v1460 = vmul.f32 %v1459, %v1444
    %vm1461 = vweird.f32 %v1317
    %v1462 = vadd.s32 %v1445, 3
    %v1463 = vand.u32 %v1462, 3
    %vm1464 = vcmp.lt.s32.totalorder %v1463, 2
    %vm1465 = vcmp.eq.s32.totalorder %v1463, 0
    %v1466 = vxor.u32 %v1460, 2147483648
    %v1467 = vsel %vm1465, %v1452, %v1466
    %vm1468 = vcmp.eq.s32.totalorder %v1463, 2
    %v1469 = vxor.u32 %v1452, 2147483648
    %v1470 = vsel %vm1468, %v1469, %v1460
    %v1471 = vsel %vm1464, %v1467, %v1470
    %v1472 = vsel %vm1461, nan, %v1471
    %v1473 = vand.u32 2147483647, %v1317
    %vm1474 = vcmp.le.f32.partialorder %v1473, 0.7853982
    %vm1475 = vcmp.lt.s32.totalorder %v1317, 0
    %v1476 = vand.u32 %v1317, 2139095040
    %v1477 = vshrl.u32 %v1476, 23
    %v1478 = vsub.s32 %v1477, 127
    %v1479 = vand.u32 2147483647, %v1317
    %v1480 = vand.u32 %v1479, 8388607
    %v1481 = vor.u32 %v1480, 8388608
    %v1482 = vsub.s32 0, %v1481
    %v1483 = vadd.s32 %v1478, 1
    %vm1484 = vcmp.gt.s32.totalorder %v1483, 0
    %v1485 = vsel %vm1484, %v1483, 0
    %v1486 = vshrl.u32 %v1485, 5
    %v1487 = vand.u32 %v1485, 31
    %v1488 = vsub.s32 32, %v1487
    %v1489 = vshrl.u32 683565275, %v1488
    %v1490 = vshll.u32 683565275, %v1487
    %v1491 = vshrl.u32 2475754826, %v1488
    %v1492 = vor.u32 %v1490, %v1491
    %v1493 = vshll.u32 2475754826, %v1487
    %v1494 = vshrl.u32 2131351028, %v1488
    %v1495 = vor.u32 %v1493, %v1494
    %v1496 = vshll.u32 2131351028, %v1487
    %v1497 = vshrl.u32 2102212464, %v1488
    %v1498 = vor.u32 %v1496, %v1497
    %v1499 = vshll.u32 2102212464, %v1487
    %v1500 = vshrl.u32 920167782, %v1488
    %v1501 = vor.u32 %v1499, %v1500
    %v1502 = vshll.u32 920167782, %v1487
    %v1503 = vshrl.u32 1326507024, %v1488
    %v1504 = vor.u32 %v1502, %v1503
    %vm1505 = vcmp.lt.s32.totalorder %v1486, 1
    %vm1506 = vcmp.lt.s32.totalorder %v1486, 2
    %vm1507 = vcmp.lt.s32.totalorder %v1486, 3
    %vm1508 = vcmp.lt.s32.totalorder %v1486, 4
    %v1509 = vsel %vm1505, %v1489, %v1492
    %v1510 = vsel %vm1508, %v1498, 2102212464
    %v1511 = vsel %vm1507, %v1495, %v1510
    %v1512 = vsel %vm1506, %v1509, %v1511
    %v1513 = vsel %vm1505, %v1492, %v1495
    %v1514 = vsel %vm1508, %v1501, 920167782
    %v1515 = vsel %vm1507, %v1498, %v1514
    %v1516 = vsel %vm1506, %v1513, %v1515
    %v1517 = vsel %vm1505, %v1495, %v1498
    %v1518 = vsel %vm1508, %v1504, 1326507024
    %v1519 = vsel %vm1507, %v1501, %v1518
    %v1520 = vsel %vm1506, %v1517, %v1519
    %v1521 = vshll.u32 %v1481, 8
    %v1522 = vand.u32 %v1521, 65535
    %v1523 = vshrl.u32 %v1521, 16
    %v1524 = vand.u32 %v1520, 65535
    %v1525 = vshrl.u32 %v1520, 16
    %v1526 = vmul.u32 %v1522, %v1524
    %v1527 = vmul.u32 %v1522, %v1525
    %v1528 = vmul.u32 %v1523, %v1524
    %v1529 = vmul.u32 %v1523, %v1525
    %v1530 = vshll.u32 %v1527, 16
    %v1531 = vshrl.u32 %v1527, 16
    %v1532 = vshll.u32 %v1528, 16
    %v1533 = vshrl.u32 %v1528, 16
    %vm1534 = vc.u32 %v1526, %v1530
    %v1535 = vsel %vm1534, 1, 0
    %v1536 = vadd.s32 %v1526, %v1530
    %v1537 = vadd.s32 %v1529, %v1535
    %vm1538 = vc.u32 %v1536, %v1532
    %v1539 = vsel %vm1538, 1, 0
    %v1540 = vadd.s32 %v1536, %v1532
    %v1541 = vadd.s32 %v1537, %v1539
    %v1542 = vadd.s32 %v1541, %v1531
    %v1543 = vadd.s32 %v1542, %v1533
    %v1544 = vand.u32 %v1521, 65535
    %v1545 = vshrl.u32 %v1521, 16
    %v1546 = vand.u32 %v1516, 65535
    %v1547 = vshrl.u32 %v1516, 16
    %v1548 = vmul.u32 %v1544, %v1546
    %v1549 = vmul.u32 %v1544, %v1547
    %v1550 = vmul.u32 %v1545, %v1546
    %v1551 = vmul.u32 %v1545, %v1547
    %v1552 = vshll.u32 %v1549, 16
    %v1553 = vshrl.u32 %v1549, 16
    %v1554 = vshll.u32 %v1550, 16
    %v1555 = vshrl.u32 %v1550, 16
    %vm1556 = vc.u32 %v1548, %v1552
    %v1557 = vsel %vm1556, 1, 0
    %v1558 = vadd.s32 %v1548, %v1552
    %v1559 = vadd.s32 %v1551, %v1557
    %vm1560 = vc.u32 %v1558, %v1554
    %v1561 = vsel %vm1560, 1, 0
    %v1562 = vadd.s32 %v1558, %v1554
    %v1563 = vadd.s32 %v1559, %v1561
    %v1564 = vadd.s32 %v1563, %v1553
    %v1565 = vadd.s32 %v1564, %v1555
    %v1566 = vmul.u32 %v1521, %v1512
    %v1567 = vadd.s32 %v1543, %v1562
    %vm1568 = vc.u32 %v1543, %v1562
    %v1569 = vadd.s32 %v1565, 1
    %v1570 = vsel %vm1568, %v1569, %v1565
    %v1571 = vadd.s32 %v1566, %v1570
    %v1572 = vadd.s32 %v1571, 536870912
    %v1573 = vshrl.u32 %v1572, 30
    %v1574 = vshll.u32 %v1573, 30
    %v1575 = vsub.s32 %v1571, %v1574
    %vm1576 = vcmp.lt.s32.totalorder %v1575, 0
    %v1577 = vsub.s32 0, %v1575
    %v1578 = vsel %vm1576, %v1577, %v1575
    %v1579 = vclz %v1578
    %v1580 = vsub.s32 %v1579, 2
    %vm1581 = vcmp.gt.s32.totalorder 0, %v1580
    %v1582 = vsel %vm1581, 0, %v1580
    %v1583 = vsub.s32 32, %v1582
    %v1584 = vshll.u32 %v1575, %v1582
    %v1585 = vshrl.u32 %v1567, %v1583
    %v1586 = vor.u32 %v1584, %v1585
    %v1587 = vsub.s32 4294967266, %v1582
    %v1588 = vadd.s32 %v1587, 127
    %v1589 = vshll.u32 %v1588, 23
    %v1590 = vor.u32 4788187, %v1589
    %v1591 = vand.u32 2147483647, %v1590
    %v1593 = vcvt.s32.f32 %v1586
    %v1594 = vmul.f32 %v1593, %v1591
    %v1595 = vxor.u32 %v1594, 2147483648
    %v1596 = vsel %vm1475, %v1595, %v1594
    %v1597 = vsub.s32 4, %v1573
    %v1598 = vsel %vm1475, %v1597, %v1573
    %v1599 = vsel %vm1474, %v1317, %v1596
    %v1600 = vsel %vm1474, 0, %v1598
    %v1601 = vmul.f32 %v1599, %v1599
    %v1602 = vmul.f32 %v1601, -0.001358992
    %v1603 = vadd.f32 %v1602, 0.041655596
    %v1604 = vmul.f32 %v1601, %v1603
    %v1605 = vadd.f32 %v1604, -0.4999988
    %v1606 = vmul.f32 %v1601, %v1605
    %v1607 = vadd.f32 1.0, %v1606
    %v1608 = vmul.f32 %v1599, %v1599
    %v1609 = vmul.f32 %v1608, -0.00019511016
    %v1610 = vadd.f32 %v1609, 0.008332121
    %v1611 = vmul.f32 %v1608, %v1610
    %v1612 = vadd.f32 %v1611, -0.16666654
    %v1613 = vmul.f32 %v1608, %v1612
    %v1614 = vadd.f32 %v1613, 1.0
    %v1615 = vmul.f32 %v1614, %v1599
    %vm1616 = vweird.f32 %v1317
    %v1617 = vand.u32 %v1600, 3
    %vm1618 = vcmp.lt.s32.totalorder %v1617, 2
    %vm1619 = vcmp.eq.s32.totalorder %v1617, 0
    %v1620 = vxor.u32 %v1615, 2147483648
    %v1621 = vsel %vm1619, %v1607, %v1620
    %vm1622 = vcmp.eq.s32.totalorder %v1617, 2
    %v1623 = vxor.u32 %v1607, 2147483648
    %v1624 = vsel %vm1622, %v1623, %v1615
    %v1625 = vsel %vm1618, %v1621, %v1624
    %v1626 = vsel %vm1616, nan, %v1625
    %s1627 = scalar_lea.vmem [#allocation5], 136
    %1628 = vst [vmem:[%s1627] sm:$0xff] %v1472
    %s1629 = scalar_lea.vmem [#allocation5], 144
    %1630 = vst [vmem:[%s1629] sm:$0xff] %v1626
    %v1631 = vmul.f32 %v1472, 2.0
    %v1632 = vmul.f32 %v1631, %v1626
    %s1633 = scalar_lea.vmem [#allocation5], 152
    %1634 = vst [vmem:[%s1633] sm:$0xff] %v1632
    %v1635 = vmul.f32 %v1631, %v1472
    %v1636 = vsub.f32 1.0, %v1635
    %s1637 = scalar_lea.vmem [#allocation5], 160
    %1638 = vst [vmem:[%s1637] sm:$0xff] %v1636
    // Predicated region
    $region10: #{tpu_custom_call.1} parent=1 // pred_check
      _
    $region11: #{tpu_custom_call.1} parent=1 // pred_check_branch
      %1640 = sbr.rel (0) target = $region13
    $region12: #{tpu_custom_call.1} parent=1 // pred_region
      %1642 = vsyncadd [#allocation4], 0
      %s1643 = sshll.u32 [#allocation5], 4
      %s1644 = int_to_ptr.vmem [resolvable:$true] %s1643
      %s1645 = sshll.u32 %s1, 4
      %s1646 = int_to_ptr.hbm [resolvable:$true] %s1645
      %1651 = dma.vmem_to_hbm [thread:$0]  %s1644, 2688, %s1646, [#allocation4], 128, 128, 8
    $region13: #{tpu_custom_call.1} parent=1 // pred_fallthru
      _
    // Predicated region
    $region14: #{tpu_custom_call.1} parent=1 // pred_check
      _
    $region15: #{tpu_custom_call.1} parent=1 // pred_check_branch
      %1653 = sbr.rel (0) target = $region17
    $region16: #{tpu_custom_call.1} parent=1 // pred_region
      %1655 = dma.done [#allocation4], 2688
    $region17: #{tpu_custom_call.1} parent=1 // pred_fallthru
      _
    %1656 = vsyncpa [#allocation3], 1
    %1657 = vsyncpa [#allocation4], 1

</llo_original>
